<compile_context>
chip_gen: v5e
topology: v5e:2x2
jax: 0.10.0
libtpu: 0.0.40
codegen_flags: <defaults>
</compile_context>

<pallas_src>
import functools

import jax
import jax.numpy as jnp
from jax.experimental import pallas as pl
from jax.experimental.pallas import tpu as pltpu


def _round_up(x: int, m: int) -> int:
    return ((x + m - 1) // m) * m


@functools.lru_cache(maxsize=1)
def _default_fuse_layer0() -> bool:
    """Fused (tm, k*V_pad) layer-0 matmul on v6e/v7x; per-slot dots on v5e."""
    try:
        kind = jax.devices()[0].device_kind.lower()
    except Exception:
        return True
    # v5e MXU is 128-deep (per-slot K=128 already fills it) and has a single
    # vector-store slot, so the slab writes would become the binding slot.
    return "v5" not in kind


def _make_kgram_kernel(k: int, v_pad: int, num_linear: int, fuse_layer0: bool):
    """Kernel factory.  refs = (w0, b0, w1, b1, ..., out[, slab])."""

    def kernel(win_ref, *refs):
        if fuse_layer0:
            slab_ref = refs[-1]
            out_ref = refs[-2]
            wb = refs[:-2]
        else:
            slab_ref = None
            out_ref = refs[-1]
            wb = refs[:-1]
        w0_ref, b0_ref = wb[0], wb[1]
        rest = wb[2:]

        # Small (1, V_pad) lane iota; the compare broadcasts it over rows so it
        # never occupies tm/8 live vregs.
        col = jax.lax.broadcasted_iota(jnp.int32, (1, v_pad), 1)

        if fuse_layer0:
            # Build the (tm, k*V_pad) one-hot slab in VMEM scratch, then a
            # single K = k*V_pad matmul; bias folded into the same add.
            for j in range(k):
                tok = win_ref[:, j:j + 1]                       # (tm, 1) int32
                slab_ref[:, j * v_pad:(j + 1) * v_pad] = (
                    (col == tok).astype(jnp.bfloat16))
            h = (jnp.dot(slab_ref[...], w0_ref[...],
                         preferred_element_type=jnp.float32)
                 + b0_ref[...])
        else:
            # v5e path: k accumulated K=V_pad dots, no slab stores.
            acc = None
            for j in range(k):
                tok = win_ref[:, j:j + 1]
                oh = (col == tok).astype(jnp.bfloat16)          # (tm, V_pad)
                part = jnp.dot(oh, w0_ref[j * v_pad:(j + 1) * v_pad, :],
                               preferred_element_type=jnp.float32)
                acc = part if acc is None else acc + part
            h = acc + b0_ref[...]

        h = h * jax.nn.sigmoid(h)                               # SiLU

        # Remaining layers: Linear (+ SiLU except after the last).
        for li in range(num_linear - 1):
            w = rest[2 * li]                                    # (in, out) bf16
            b = rest[2 * li + 1]                                # (1, out)  f32
            h = (jnp.dot(h.astype(jnp.bfloat16), w[...],
                         preferred_element_type=jnp.float32)
                 + b[...])
            if li < num_linear - 2:
                h = h * jax.nn.sigmoid(h)

        out_ref[...] = h.astype(out_ref.dtype)

    return kernel


def init_params(key, vocab_size, kgram_k, embed_size, num_inner_layers):
    """Deterministic init mimicking nn.Linear (uniform +-1/sqrt(fan_in)).

    Returns a list of (W, b) with W of shape (in_features, out_features).
    """
    dims = [kgram_k * vocab_size, embed_size]
    for _ in range(num_inner_layers - 1):
        dims.append(embed_size)
    dims.append(vocab_size)

    params = []
    for fan_in, fan_out in zip(dims[:-1], dims[1:]):
        key, kw, kb = jax.random.split(key, 3)
        bound = 1.0 / (fan_in ** 0.5)
        w = jax.random.uniform(kw, (fan_in, fan_out), jnp.float32, -bound, bound)
        b = jax.random.uniform(kb, (fan_out,), jnp.float32, -bound, bound)
        params.append((w, b))
    return params


def prepare_params(params, *, kgram_k, vocab_size):
    """One-time weight prep: pad vocab/embed to 128-lane multiples, cast bf16.

    Returns a flat tuple (w0, b0, w1, b1, ...):
      w0 : (k * V_pad, E_pad) bf16   (layer-0 rows zero-padded per k-slot)
      wi : (in_pad, out_pad)  bf16
      bi : (1, out_pad)       f32
    Pad rows/cols/biases are zero, so padded channels stay exactly 0 through
    every SiLU and slicing logits back to vocab_size is exact.
    """
    v_pad = _round_up(vocab_size, 128)
    flat = []
    for idx, (w, b) in enumerate(params):
        fan_in, fan_out = w.shape
        out_pad = _round_up(fan_out, 128)
        if idx == 0:
            assert fan_in == kgram_k * vocab_size
            w3 = w.reshape(kgram_k, vocab_size, fan_out)
            w3 = jnp.pad(w3, ((0, 0), (0, v_pad - vocab_size),
                              (0, out_pad - fan_out)))
            w_p = w3.reshape(kgram_k * v_pad, out_pad)
        else:
            in_pad = _round_up(fan_in, 128)
            w_p = jnp.pad(w, ((0, in_pad - fan_in), (0, out_pad - fan_out)))
        b_p = jnp.pad(b, (0, out_pad - fan_out)).reshape(1, out_pad)
        flat.append(w_p.astype(jnp.bfloat16))
        flat.append(b_p.astype(jnp.float32))
    return tuple(flat)


def _build_windows(tokens_seq, k):
    """(seq, batch) int -> (seq*batch, k) int32 k-gram windows (left-pad 0)."""
    seq_len, _ = tokens_seq.shape
    padded = jnp.pad(tokens_seq, ((k - 1, 0), (0, 0)), constant_values=0)
    windows = jnp.stack([padded[j:j + seq_len] for j in range(k)], axis=-1)
    return windows.reshape(seq_len * tokens_seq.shape[1], k).astype(jnp.int32)


@functools.partial(
    jax.jit,
    static_argnames=("kgram_k", "vocab_size", "tile_rows", "fuse_layer0"))
def kgram_mlp_seq_forward_prepared(tokens_seq, prepped, *, kgram_k, vocab_size,
                                   tile_rows=512, fuse_layer0=True):
    """Jitted Pallas forward using pre-padded bf16 weights from prepare_params.

    tokens_seq: (seq_len, batch) int tokens -> (seq_len, batch, vocab) f32.
    """
    seq_len, batch = tokens_seq.shape
    n_rows = seq_len * batch
    num_linear = len(prepped) // 2
    assert num_linear >= 2, "module always has first + last Linear"

    w0 = prepped[0]
    v_pad = w0.shape[0] // kgram_k           # padded vocab (multiple of 128)
    e_pad = w0.shape[1]                       # padded embed (multiple of 128)

    windows = _build_windows(tokens_seq, kgram_k)                 # (N, k)

    # Row tiling: big tiles amortize per-grid-step overhead, but keep the
    # parallel row grid >= 2 so both v7x TensorCores get work.
    tm = min(_round_up(tile_rows, 8), _round_up(n_rows, 8))
    if n_rows > 8 and _round_up(n_rows, tm) // tm < 2:
        tm = max(8, _round_up((n_rows + 1) // 2, 8))
    n_pad = _round_up(n_rows, tm)
    if n_pad != n_rows:
        windows = jnp.pad(windows, ((0, n_pad - n_rows), (0, 0)))

    kernel = _make_kgram_kernel(kgram_k, v_pad, num_linear, fuse_layer0)

    in_specs = [pl.BlockSpec((tm, kgram_k), lambda i: (i, 0))]
    for arr in prepped:
        # Constant-index weight/bias blocks: DMA'd once, resident across grid.
        in_specs.append(pl.BlockSpec(arr.shape, lambda i: (0, 0)))

    scratch_shapes = []
    if fuse_layer0:
        scratch_shapes.append(pltpu.VMEM((tm, kgram_k * v_pad), jnp.bfloat16))

    # Explicit VMEM budget from the actual resident buffers (v7x has 64 MiB).
    weight_bytes = sum(int(a.size) * a.dtype.itemsize for a in prepped)
    est = (2 * tm * max(kgram_k, 128) * 4          # windows tiles (lane-padded)
           + 2 * tm * v_pad * 4                    # output tiles
           + 2 * weight_bytes                      # pipeline double-buffers
           + (tm * kgram_k * v_pad * 2 if fuse_layer0 else 0)
           + (8 << 20))                            # headroom / internal scratch
    vmem_limit = int(min(max(est, 32 << 20), 64 << 20))
    # TODO(synk): for vocab >> 4k, tile the vocab axis / use a gather for the
    # one-hot layer instead of keeping all weights resident.

    flops = 2 * n_pad * (kgram_k * v_pad * e_pad
                         + max(num_linear - 2, 0) * e_pad * e_pad
                         + e_pad * v_pad)
    transcendentals = n_pad * e_pad * (num_linear - 1)
    bytes_accessed = n_pad * kgram_k * 4 + weight_bytes + n_pad * v_pad * 4

    out = pl.pallas_call(
        kernel,
        out_shape=jax.ShapeDtypeStruct((n_pad, v_pad), jnp.float32),
        grid=(n_pad // tm,),
        in_specs=in_specs,
        out_specs=pl.BlockSpec((tm, v_pad), lambda i: (i, 0)),
        scratch_shapes=scratch_shapes,
        compiler_params=pltpu.CompilerParams(
            dimension_semantics=("parallel",),
            vmem_limit_bytes=vmem_limit,
        ),
        cost_estimate=pl.CostEstimate(
            flops=int(flops),
            transcendentals=int(transcendentals),
            bytes_accessed=int(bytes_accessed),
        ),
    )(windows, *prepped)

    return out[:n_rows, :vocab_size].reshape(seq_len, batch, vocab_size)


def kgram_mlp_seq_forward(tokens_seq, params, *, kgram_k, vocab_size,
                          tile_rows=512, fuse_layer0=None):
    """Convenience wrapper: prep weights (ideally cache this) + jitted forward."""
    if fuse_layer0 is None:
        fuse_layer0 = _default_fuse_layer0()
    prepped = prepare_params(params, kgram_k=kgram_k, vocab_size=vocab_size)
    return kgram_mlp_seq_forward_prepared(
        tokens_seq, prepped, kgram_k=kgram_k, vocab_size=vocab_size,
        tile_rows=tile_rows, fuse_layer0=fuse_layer0)


def kgram_mlp_seq_reference(tokens_seq, params, *, kgram_k, vocab_size,
                            matmul_dtype=jnp.float32):
    """Pure-JAX reference. f32 matches the PyTorch forward; bf16 mirrors the
    kernel's mixed-precision matmuls (f32 accumulation either way)."""
    seq_len, batch = tokens_seq.shape
    windows = _build_windows(tokens_seq, kgram_k)                     # (N, k)
    oh = jax.nn.one_hot(windows, vocab_size, dtype=jnp.float32)       # (N,k,V)
    x = oh.reshape(seq_len * batch, kgram_k * vocab_size)
    for i, (w, b) in enumerate(params):
        x = (jnp.dot(x.astype(matmul_dtype), w.astype(matmul_dtype),
                     preferred_element_type=jnp.float32) + b)
        if i < len(params) - 1:
            x = jax.nn.silu(x)
    return x.reshape(seq_len, batch, vocab_size)


if __name__ == "__main__":

    def run_case(seq_len, batch, vocab_size, kgram_k, embed_size,
                 num_inner_layers, seed):
        key = jax.random.PRNGKey(seed)
        k_tok, k_par = jax.random.split(key)
        tokens_seq = jax.random.randint(
            k_tok, (seq_len, batch), minval=0, maxval=vocab_size,
            dtype=jnp.int32)
        params = init_params(k_par, vocab_size, kgram_k, embed_size,
                             num_inner_layers)

        # One-time weight prep (pad + bf16 cast) outside the per-call path,
        # then the jitted Pallas forward.
        prepped = prepare_params(params, kgram_k=kgram_k,
                                 vocab_size=vocab_size)
        logits = jax.block_until_ready(
            kgram_mlp_seq_forward_prepared(
                tokens_seq, prepped, kgram_k=kgram_k, vocab_size=vocab_size,
                fuse_layer0=_default_fuse_layer0()))
        assert logits.shape == (seq_len, batch, vocab_size)

        # Tight check vs a bf16-matmul mirror of the kernel's arithmetic.
        ref_bf16 = kgram_mlp_seq_reference(
            tokens_seq, params, kgram_k=kgram_k, vocab_size=vocab_size,
            matmul_dtype=jnp.bfloat16)
        assert jnp.allclose(logits, ref_bf16, atol=5e-3, rtol=5e-3), \
            "mismatch vs bf16 mirror reference"

        # Looser check vs the fp32 spec (bf16 weight/activation casts only).
        ref_f32 = kgram_mlp_seq_reference(
            tokens_seq, params, kgram_k=kgram_k, vocab_size=vocab_size,
            matmul_dtype=jnp.float32)
        assert jnp.allclose(logits, ref_f32, atol=3e-2, rtol=3e-2), \
            "mismatch vs fp32 reference"

    # Case 1: 512 rows -> tm=256, row grid of 2 (keeps both v7x TensorCores
    # busy via the parallel grid axis).
    run_case(seq_len=64, batch=8, vocab_size=128, kgram_k=3, embed_size=128,
             num_inner_layers=1, seed=0)

    # Case 2: ragged row count (57 -> 64), vocab=96 / embed=64 lane-padded to
    # 128, extra inner layer — exercises padding + multi-layer paths.
    run_case(seq_len=19, batch=3, vocab_size=96, kgram_k=4, embed_size=64,
             num_inner_layers=2, seed=1)

    print("KERNEL_OK")
</pallas_src>

<mosaic_0001>
module attributes {stable_mosaic.version = 11 : i64} {
  func.func @kernel(%arg0: i32, %arg1: memref<256x3xi32, #tpu.memory_space<vmem>>, %arg2: memref<384x128xbf16, #tpu.memory_space<vmem>>, %arg3: memref<1x128xf32, #tpu.memory_space<vmem>>, %arg4: memref<128x128xbf16, #tpu.memory_space<vmem>>, %arg5: memref<1x128xf32, #tpu.memory_space<vmem>>, %arg6: memref<256x128xf32, #tpu.memory_space<vmem>>, %arg7: memref<256x384xbf16, #tpu.memory_space<vmem>>) attributes {dimension_semantics = [#tpu.dimension_semantics<parallel>], iteration_bounds = array<i64: 2>, scalar_prefetch = 0 : i64, scratch_operands = 1 : i64, tpu.core_type = #tpu.core_type<tc>, window_params = [{transform_indices = @transform_0, window_bounds = array<i64: 256, 3>}, {pipeline_mode = #tpu.pipeline_mode<synchronous>, transform_indices = @transform_1, window_bounds = array<i64: 384, 128>}, {pipeline_mode = #tpu.pipeline_mode<synchronous>, transform_indices = @transform_2, window_bounds = array<i64: 1, 128>}, {pipeline_mode = #tpu.pipeline_mode<synchronous>, transform_indices = @transform_3, window_bounds = array<i64: 128, 128>}, {pipeline_mode = #tpu.pipeline_mode<synchronous>, transform_indices = @transform_4, window_bounds = array<i64: 1, 128>}, {transform_indices = @transform_5, window_bounds = array<i64: 256, 128>}]} {
    %0 = tpu.iota {dimensions = array<i32: 1>} : vector<1x128xi32>
    %c0 = arith.constant 0 : index
    %c0_0 = arith.constant 0 : index
    %1 = vector.load %arg1[%c0, %c0_0] : memref<256x3xi32, #tpu.memory_space<vmem>>, vector<256x1xi32>
    %2 = vector.broadcast %0 : vector<1x128xi32> to vector<256x128xi32>
    %3 = vector.broadcast %1 : vector<256x1xi32> to vector<256x128xi32>
    %4 = arith.cmpi eq, %2, %3 : vector<256x128xi32>
    %5 = arith.extui %4 : vector<256x128xi1> to vector<256x128xi32>
    %6 = arith.sitofp %5 : vector<256x128xi32> to vector<256x128xf32>
    %7 = arith.truncf %6 : vector<256x128xf32> to vector<256x128xbf16>
    %c0_1 = arith.constant 0 : index
    %c0_2 = arith.constant 0 : index
    %8 = vector.load %arg7[%c0_1, %c0_2] : memref<256x384xbf16, #tpu.memory_space<vmem>>, vector<256x128xbf16>
    tpu.vector_store %arg7[%c0_1, %c0_2], %7 {strides = array<i32>} : memref<256x384xbf16, #tpu.memory_space<vmem>>, vector<256x128xbf16>,
    %c0_3 = arith.constant 0 : index
    %c1 = arith.constant 1 : index
    %9 = vector.load %arg1[%c0_3, %c1] : memref<256x3xi32, #tpu.memory_space<vmem>>, vector<256x1xi32>
    %10 = vector.broadcast %0 : vector<1x128xi32> to vector<256x128xi32>
    %11 = vector.broadcast %9 : vector<256x1xi32> to vector<256x128xi32>
    %12 = arith.cmpi eq, %10, %11 : vector<256x128xi32>
    %13 = arith.extui %12 : vector<256x128xi1> to vector<256x128xi32>
    %14 = arith.sitofp %13 : vector<256x128xi32> to vector<256x128xf32>
    %15 = arith.truncf %14 : vector<256x128xf32> to vector<256x128xbf16>
    %c0_4 = arith.constant 0 : index
    %c128 = arith.constant 128 : index
    %16 = vector.load %arg7[%c0_4, %c128] : memref<256x384xbf16, #tpu.memory_space<vmem>>, vector<256x128xbf16>
    tpu.vector_store %arg7[%c0_4, %c128], %15 {strides = array<i32>} : memref<256x384xbf16, #tpu.memory_space<vmem>>, vector<256x128xbf16>,
    %c0_5 = arith.constant 0 : index
    %c2 = arith.constant 2 : index
    %17 = vector.load %arg1[%c0_5, %c2] : memref<256x3xi32, #tpu.memory_space<vmem>>, vector<256x1xi32>
    %18 = vector.broadcast %0 : vector<1x128xi32> to vector<256x128xi32>
    %19 = vector.broadcast %17 : vector<256x1xi32> to vector<256x128xi32>
    %20 = arith.cmpi eq, %18, %19 : vector<256x128xi32>
    %21 = arith.extui %20 : vector<256x128xi1> to vector<256x128xi32>
    %22 = arith.sitofp %21 : vector<256x128xi32> to vector<256x128xf32>
    %23 = arith.truncf %22 : vector<256x128xf32> to vector<256x128xbf16>
    %c0_6 = arith.constant 0 : index
    %c256 = arith.constant 256 : index
    %24 = vector.load %arg7[%c0_6, %c256] : memref<256x384xbf16, #tpu.memory_space<vmem>>, vector<256x128xbf16>
    tpu.vector_store %arg7[%c0_6, %c256], %23 {strides = array<i32>} : memref<256x384xbf16, #tpu.memory_space<vmem>>, vector<256x128xbf16>,
    %c0_7 = arith.constant 0 : index
    %c0_8 = arith.constant 0 : index
    %25 = vector.load %arg7[%c0_7, %c0_8] : memref<256x384xbf16, #tpu.memory_space<vmem>>, vector<256x384xbf16>
    %c0_9 = arith.constant 0 : index
    %c0_10 = arith.constant 0 : index
    %26 = vector.load %arg2[%c0_9, %c0_10] : memref<384x128xbf16, #tpu.memory_space<vmem>>, vector<384x128xbf16>
    %cst = arith.constant dense<0.000000e+00> : vector<256x128xf32>
    %27 = tpu.matmul %25, %26, %cst {dimension_numbers = #tpu.dot_dimension_numbers<[1], [0], [0], [1], [0, 0, 1, 1], [], []>} : vector<256x384xbf16>, vector<384x128xbf16>, vector<256x128xf32> -> vector<256x128xf32>
    %c0_11 = arith.constant 0 : index
    %c0_12 = arith.constant 0 : index
    %28 = vector.load %arg3[%c0_11, %c0_12] : memref<1x128xf32, #tpu.memory_space<vmem>>, vector<1x128xf32>
    %29 = vector.broadcast %28 : vector<1x128xf32> to vector<256x128xf32>
    %30 = arith.addf %27, %29 : vector<256x128xf32>
    %31 = arith.negf %30 : vector<256x128xf32>
    %32 = math.exp %31 : vector<256x128xf32>
    %cst_13 = arith.constant 1.000000e+00 : f32
    %33 = vector.broadcast %cst_13 : f32 to vector<256x128xf32>
    %34 = arith.addf %33, %32 : vector<256x128xf32>
    %35 = arith.divf %33, %34 : vector<256x128xf32>
    %36 = arith.mulf %30, %35 : vector<256x128xf32>
    %37 = arith.truncf %36 : vector<256x128xf32> to vector<256x128xbf16>
    %c0_14 = arith.constant 0 : index
    %c0_15 = arith.constant 0 : index
    %38 = vector.load %arg4[%c0_14, %c0_15] : memref<128x128xbf16, #tpu.memory_space<vmem>>, vector<128x128xbf16>
    %cst_16 = arith.constant dense<0.000000e+00> : vector<256x128xf32>
    %39 = tpu.matmul %37, %38, %cst_16 {dimension_numbers = #tpu.dot_dimension_numbers<[1], [0], [0], [1], [0, 0, 1, 1], [], []>} : vector<256x128xbf16>, vector<128x128xbf16>, vector<256x128xf32> -> vector<256x128xf32>
    %c0_17 = arith.constant 0 : index
    %c0_18 = arith.constant 0 : index
    %40 = vector.load %arg5[%c0_17, %c0_18] : memref<1x128xf32, #tpu.memory_space<vmem>>, vector<1x128xf32>
    %41 = vector.broadcast %40 : vector<1x128xf32> to vector<256x128xf32>
    %42 = arith.addf %39, %41 : vector<256x128xf32>
    %c0_19 = arith.constant 0 : index
    %c0_20 = arith.constant 0 : index
    %43 = vector.load %arg6[%c0_19, %c0_20] : memref<256x128xf32, #tpu.memory_space<vmem>>, vector<256x128xf32>
    tpu.vector_store %arg6[%c0_19, %c0_20], %42 {strides = array<i32>} : memref<256x128xf32, #tpu.memory_space<vmem>>, vector<256x128xf32>,
    return
  }
  func.func @transform_0(%arg0: i32) -> (i32, i32) {
    %c0_i32 = arith.constant 0 : i32
    %c0_i32_0 = arith.constant 0 : i32
    return %arg0, %c0_i32 : i32, i32
  }
  func.func @transform_1(%arg0: i32) -> (i32, i32) {
    %c0_i32 = arith.constant 0 : i32
    %c0_i32_0 = arith.constant 0 : i32
    %c0_i32_1 = arith.constant 0 : i32
    return %c0_i32, %c0_i32_0 : i32, i32
  }
  func.func @transform_2(%arg0: i32) -> (i32, i32) {
    %c0_i32 = arith.constant 0 : i32
    %c0_i32_0 = arith.constant 0 : i32
    %c0_i32_1 = arith.constant 0 : i32
    return %c0_i32, %c0_i32_0 : i32, i32
  }
  func.func @transform_3(%arg0: i32) -> (i32, i32) {
    %c0_i32 = arith.constant 0 : i32
    %c0_i32_0 = arith.constant 0 : i32
    %c0_i32_1 = arith.constant 0 : i32
    return %c0_i32, %c0_i32_0 : i32, i32
  }
  func.func @transform_4(%arg0: i32) -> (i32, i32) {
    %c0_i32 = arith.constant 0 : i32
    %c0_i32_0 = arith.constant 0 : i32
    %c0_i32_1 = arith.constant 0 : i32
    return %c0_i32, %c0_i32_0 : i32, i32
  }
  func.func @transform_5(%arg0: i32) -> (i32, i32) {
    %c0_i32 = arith.constant 0 : i32
    %c0_i32_0 = arith.constant 0 : i32
    return %arg0, %c0_i32 : i32, i32
  }
}

</mosaic_0001>

<llo_original>
// kernel: kgram_mlp_seq_forward_prepared.1
$region0: #{kgram_mlp_seq_forward_prepared.1}
  #allocation0 [shape = 'u32[]', space=smem, size = 0x4, offset = 0x4, fixed_abs, tag = 'smem constant byte address 0x4 - core index']
  #allocation1 [shape = 'u32[72,128]{1,0:T(1,128)}', space=vmem, size = 0x9000, scoped, tag = 'internal scratch']
  #allocation2 [shape = 'bf16[256,384]{1,0:T(8,128)(2,1)}', space=vmem, size = 0x30000, scoped, tag = 'scratch operand']
  %s0 = inlined_call_operand.vmem [shape: s32[512,3], index: 0, kind: input, shape index: {}]
  %s1 = inlined_call_operand.vmem [shape: bf16[384,128], index: 1, kind: input, shape index: {}]
  %s2 = inlined_call_operand.vmem [shape: f32[1,128], index: 2, kind: input, shape index: {}]
  %s3 = inlined_call_operand.vmem [shape: bf16[128,128], index: 3, kind: input, shape index: {}]
  %s4 = inlined_call_operand.vmem [shape: f32[1,128], index: 4, kind: input, shape index: {}]
  %s5 = inlined_call_operand.hbm [shape: f32[512,128], index: 5, kind: output, shape index: {}]
  %s6 = sld [smem:[#allocation0]]
  $region53: #{kgram_mlp_seq_forward_prepared.1} parent=0
    _
  %s8 = ssub.s32 1, %s6
  %s9 = scalar_select 0, %s8, %s6
  $region1: #{kgram_mlp_seq_forward_prepared.1} parent=0
    #allocation3 [shape = 'u8[262144]{0}', space=vmem, size = 0x40000, scoped, tag = 'output window, operand 0']
    #allocation4 [shape = 's32[2]{0}', space=sflag, size = 0x8, scoped, tag = 'scoped memory for kgram_mlp_seq_forward_prepared.1']
    %10 = vsyncpa [#allocation4], 0
    %s11 = scalar_lea.sflag [#allocation4], 1
    %12 = vsyncpa %s11, 0
    loop: start=0, step=1, limit=4
    $region2: #{kgram_mlp_seq_forward_prepared.1} parent=1 // loop_pre_header
      _
    $region3: #{kgram_mlp_seq_forward_prepared.1} parent=1 // loop_header
      %s14 = sphi 0, %s18
      %p15 = scmp.ge.s32.totalorder %s14, 4
      %s24 = sphi 0, %s26
      %s27 = sphi 0, %s24
      %s28 = sphi 0, %s27
      %s44 = sphi 0, %s28
      %s48 = sphi 0, %s48
      %s50 = sphi 0, %s48
      %s51 = sphi 0, %s50
      %s65 = sphi 0, %s51
      %s69 = sphi 0, %s69
      %s71 = sphi 0, %s69
      %s72 = sphi 0, %s71
      %s86 = sphi 0, %s72
      %s90 = sphi 0, %s90
      %s92 = sphi 0, %s90
      %s93 = sphi 0, %s92
      %s107 = sphi 0, %s93
      %s111 = sphi 0, %s111
      %s113 = sphi 0, %s111
      %s114 = sphi 0, %s113
      %s128 = sphi 0, %s114
      %s134 = sphi 0, %s136
      %s137 = sphi 0, %s134
      %s138 = sphi 0, %s137
      %s154 = sphi 0, %s138
    $region4: #{kgram_mlp_seq_forward_prepared.1} parent=1 // loop_header_branch
      %17 = sbr.rel (%p15) target = $region8
    $region5: #{kgram_mlp_seq_forward_prepared.1} parent=1 // loop_body
      %s19 = ssub.s32 %s14, 1
      %s20 = ssub.s32 %s14, 2
      %s21 = sadd.s32 %s14, 1
      %s22 = ssub.s32 %s14, %s21
      %p23 = scmp.eq.s32.totalorder %s22, 0
      %s25 = sadd.s32 %s24, 1
      %s26 = scalar_select %p23, %s24, %s25
      %p29 = pneg %p23
      %p30 = scmp.eq.s32.totalorder %s14, 1
      %p31 = por %p29, %p30
      %p32 = scmp.ne.s32.totalorder %s24, %s27
      %p33 = scmp.eq.s32.totalorder %s14, 0
      %p34 = por %p32, %p33
      %p35 = scmp.ne.s32.totalorder %s24, %s27
      %p36 = scmp.eq.s32.totalorder %s19, 1
      %p37 = por %p35, %p36
      %p38 = scmp.ne.s32.totalorder %s27, %s28
      %p39 = scmp.eq.s32.totalorder %s19, 0
      %p40 = por %p38, %p39
      %p41 = scmp.ne.s32.totalorder %s27, %s28
      %p42 = scmp.eq.s32.totalorder %s20, 1
      %p43 = por %p41, %p42
      %p45 = scmp.ne.s32.totalorder %s28, %s44
      %p46 = scmp.eq.s32.totalorder %s20, 0
      %p47 = por %p45, %p46
      %s49 = sadd.s32 %s48, 1
      %p52 = scmp.eq.s32.totalorder %s14, 1
      %p53 = scmp.ne.s32.totalorder %s48, %s50
      %p54 = scmp.eq.s32.totalorder %s14, 0
      %p55 = por %p53, %p54
      %p56 = scmp.ne.s32.totalorder %s48, %s50
      %p57 = scmp.eq.s32.totalorder %s19, 1
      %p58 = por %p56, %p57
      %p59 = scmp.ne.s32.totalorder %s50, %s51
      %p60 = scmp.eq.s32.totalorder %s19, 0
      %p61 = por %p59, %p60
      %p62 = scmp.ne.s32.totalorder %s50, %s51
      %p63 = scmp.eq.s32.totalorder %s20, 1
      %p64 = por %p62, %p63
      %p66 = scmp.ne.s32.totalorder %s51, %s65
      %p67 = scmp.eq.s32.totalorder %s20, 0
      %p68 = por %p66, %p67
      %s70 = sadd.s32 %s69, 1
      %p73 = scmp.eq.s32.totalorder %s14, 1
      %p74 = scmp.ne.s32.totalorder %s69, %s71
      %p75 = scmp.eq.s32.totalorder %s14, 0
      %p76 = por %p74, %p75
      %p77 = scmp.ne.s32.totalorder %s69, %s71
      %p78 = scmp.eq.s32.totalorder %s19, 1
      %p79 = por %p77, %p78
      %p80 = scmp.ne.s32.totalorder %s71, %s72
      %p81 = scmp.eq.s32.totalorder %s19, 0
      %p82 = por %p80, %p81
      %p83 = scmp.ne.s32.totalorder %s71, %s72
      %p84 = scmp.eq.s32.totalorder %s20, 1
      %p85 = por %p83, %p84
      %p87 = scmp.ne.s32.totalorder %s72, %s86
      %p88 = scmp.eq.s32.totalorder %s20, 0
      %p89 = por %p87, %p88
      %s91 = sadd.s32 %s90, 1
      %p94 = scmp.eq.s32.totalorder %s14, 1
      %p95 = scmp.ne.s32.totalorder %s90, %s92
      %p96 = scmp.eq.s32.totalorder %s14, 0
      %p97 = por %p95, %p96
      %p98 = scmp.ne.s32.totalorder %s90, %s92
      %p99 = scmp.eq.s32.totalorder %s19, 1
      %p100 = por %p98, %p99
      %p101 = scmp.ne.s32.totalorder %s92, %s93
      %p102 = scmp.eq.s32.totalorder %s19, 0
      %p103 = por %p101, %p102
      %p104 = scmp.ne.s32.totalorder %s92, %s93
      %p105 = scmp.eq.s32.totalorder %s20, 1
      %p106 = por %p104, %p105
      %p108 = scmp.ne.s32.totalorder %s93, %s107
      %p109 = scmp.eq.s32.totalorder %s20, 0
      %p110 = por %p108, %p109
      %s112 = sadd.s32 %s111, 1
      %p115 = scmp.eq.s32.totalorder %s14, 1
      %p116 = scmp.ne.s32.totalorder %s111, %s113
      %p117 = scmp.eq.s32.totalorder %s14, 0
      %p118 = por %p116, %p117
      %p119 = scmp.ne.s32.totalorder %s111, %s113
      %p120 = scmp.eq.s32.totalorder %s19, 1
      %p121 = por %p119, %p120
      %p122 = scmp.ne.s32.totalorder %s113, %s114
      %p123 = scmp.eq.s32.totalorder %s19, 0
      %p124 = por %p122, %p123
      %p125 = scmp.ne.s32.totalorder %s113, %s114
      %p126 = scmp.eq.s32.totalorder %s20, 1
      %p127 = por %p125, %p126
      %p129 = scmp.ne.s32.totalorder %s114, %s128
      %p130 = scmp.eq.s32.totalorder %s20, 0
      %p131 = por %p129, %p130
      %s132 = ssub.s32 %s14, %s21
      %p133 = scmp.eq.s32.totalorder %s132, 0
      %s135 = sadd.s32 %s134, 1
      %s136 = scalar_select %p133, %s134, %s135
      %p139 = pneg %p133
      %p140 = scmp.eq.s32.totalorder %s14, 1
      %p141 = por %p139, %p140
      %p142 = scmp.ne.s32.totalorder %s134, %s137
      %p143 = scmp.eq.s32.totalorder %s14, 0
      %p144 = por %p142, %p143
      %p145 = scmp.ne.s32.totalorder %s134, %s137
      %p146 = scmp.eq.s32.totalorder %s19, 1
      %p147 = por %p145, %p146
      %p148 = scmp.ne.s32.totalorder %s137, %s138
      %p149 = scmp.eq.s32.totalorder %s19, 0
      %p150 = por %p148, %p149
      %p151 = scmp.ne.s32.totalorder %s137, %s138
      %p152 = scmp.eq.s32.totalorder %s20, 1
      %p153 = por %p151, %p152
      %p155 = scmp.ne.s32.totalorder %s138, %s154
      %p156 = scmp.eq.s32.totalorder %s20, 0
      %p157 = por %p155, %p156
      %p158 = scmp.le.s32.totalorder 1, %s14
      %p159 = scmp.lt.s32.totalorder %s14, 3
      %p160 = pnand %p158, %p159
      %p161 = pneg %p160
      // Predicated region
      $region9: #{kgram_mlp_seq_forward_prepared.1} parent=5 // pred_check
        _
      $region10: #{kgram_mlp_seq_forward_prepared.1} parent=5 // pred_check_branch
        %163 = sbr.rel (%p160) target = $region12
      $region11: #{kgram_mlp_seq_forward_prepared.1} parent=5 // pred_region
        %s164 = ssub.s32 %s14, 1
        // Predicated region
        $region13: #{kgram_mlp_seq_forward_prepared.1} parent=11 // pred_check
          %p165 = pneg %p61
        $region14: #{kgram_mlp_seq_forward_prepared.1} parent=11 // pred_check_branch
          %167 = sbr.rel (%p165) target = $region16
        $region15: #{kgram_mlp_seq_forward_prepared.1} parent=11 // pred_region
          _
        $region16: #{kgram_mlp_seq_forward_prepared.1} parent=11 // pred_fallthru
          _
        // Predicated region
        $region17: #{kgram_mlp_seq_forward_prepared.1} parent=11 // pred_check
          %p168 = pneg %p82
        $region18: #{kgram_mlp_seq_forward_prepared.1} parent=11 // pred_check_branch
          %170 = sbr.rel (%p168) target = $region20
        $region19: #{kgram_mlp_seq_forward_prepared.1} parent=11 // pred_region
          _
        $region20: #{kgram_mlp_seq_forward_prepared.1} parent=11 // pred_fallthru
          _
        // Predicated region
        $region21: #{kgram_mlp_seq_forward_prepared.1} parent=11 // pred_check
          %p171 = pneg %p103
        $region22: #{kgram_mlp_seq_forward_prepared.1} parent=11 // pred_check_branch
          %173 = sbr.rel (%p171) target = $region24
        $region23: #{kgram_mlp_seq_forward_prepared.1} parent=11 // pred_region
          _
        $region24: #{kgram_mlp_seq_forward_prepared.1} parent=11 // pred_fallthru
          _
        // Predicated region
        $region25: #{kgram_mlp_seq_forward_prepared.1} parent=11 // pred_check
          %p174 = pneg %p124
        $region26: #{kgram_mlp_seq_forward_prepared.1} parent=11 // pred_check_branch
          %176 = sbr.rel (%p174) target = $region28
        $region27: #{kgram_mlp_seq_forward_prepared.1} parent=11 // pred_region
          _
        $region28: #{kgram_mlp_seq_forward_prepared.1} parent=11 // pred_fallthru
          _
      $region12: #{kgram_mlp_seq_forward_prepared.1} parent=5 // pred_fallthru
        _
      %p177 = scmp.lt.s32.totalorder %s14, 2
      // Predicated region
      $region29: #{kgram_mlp_seq_forward_prepared.1} parent=5 // pred_check
        %p178 = pneg %p177
      $region30: #{kgram_mlp_seq_forward_prepared.1} parent=5 // pred_check_branch
        %180 = sbr.rel (%p178) target = $region32
      $region31: #{kgram_mlp_seq_forward_prepared.1} parent=5 // pred_region
        // Predicated region
        $region33: #{kgram_mlp_seq_forward_prepared.1} parent=31 // pred_check
          %p181 = pneg %p34
        $region34: #{kgram_mlp_seq_forward_prepared.1} parent=31 // pred_check_branch
          %183 = sbr.rel (%p181) target = $region36
        $region35: #{kgram_mlp_seq_forward_prepared.1} parent=31 // pred_region
          %s184 = smul.u32 32, %s14
          %p185 = scmp.lt.s32.totalorder %s184, 63
          %s186 = scalar_select %p185, %s184, 63
          %s187 = smul.addr %s186, 8
          %s188 = scalar_lea.vmem %s0, %s187
          %s189 = smul.u32 32, %s14
        $region36: #{kgram_mlp_seq_forward_prepared.1} parent=31 // pred_fallthru
          _
      $region32: #{kgram_mlp_seq_forward_prepared.1} parent=5 // pred_fallthru
        _
      %p190 = scmp.le.s32.totalorder 1, %s14
      %p191 = scmp.lt.s32.totalorder %s14, 3
      %p192 = pnand %p190, %p191
      %p193 = pneg %p192
      // Predicated region
      $region37: #{kgram_mlp_seq_forward_prepared.1} parent=5 // pred_check
        _
      $region38: #{kgram_mlp_seq_forward_prepared.1} parent=5 // pred_check_branch
        %195 = sbr.rel (%p192) target = $region40
      $region39: #{kgram_mlp_seq_forward_prepared.1} parent=5 // pred_region
        %s196 = ssub.s32 %s14, 1
        %s197 = smul.u32 32, %s19
        %p198 = scmp.lt.s32.totalorder %s197, 63
        %s199 = scalar_select %p198, %s197, 63
        %s200 = smul.addr %s199, 8
        %s201 = scalar_lea.vmem %s0, %s200
        %p202 = pneg %p40
        %p203 = pneg %p37
        %p204 = pneg %p61
        %p205 = pneg %p58
        %p206 = pneg %p82
        %p207 = pneg %p79
        %p208 = pneg %p103
        %p209 = pneg %p100
        %p210 = pneg %p124
        %p211 = pneg %p121
        %p212 = pneg %p150
        %p213 = pneg %p147
        %s214 = sand.u32 %s137, 1
        %s215 = scalar_lea.sflag [#allocation4], %s214
        %s216 = sand.u32 %s137, 1
        %s217 = smul.addr %s216, 256
        %s218 = scalar_lea.vmem [#allocation3], %s217
        %s219 = smul.u32 32, %s19
        %p220 = scmp.lt.s32.totalorder %s219, 63
        %s221 = scalar_select %p220, %s219, 63
        %s222 = smul.addr %s221, 8
        %s223 = scalar_lea.vmem %s0, %s222
        %s224 = smul.u32 32, %s19
        %s225 = smul.u32 32, %s19
        %v226 = vlaneseq
        %v227 = vand.u32 %v226, 127
        %v228 = vld [vmem:[%s223] sm:$0xff]
        %v229 = vld [vmem:[%s223 + $0x8] sm:$0xff]
        %v230 = vld [vmem:[%s223 + $0x10] sm:$0xff]
        %v231 = vld [vmem:[%s223 + $0x18] sm:$0xff]
        %v232 = vld [vmem:[%s223 + $0x20] sm:$0xff]
        %v233 = vld [vmem:[%s223 + $0x28] sm:$0xff]
        %v234 = vld [vmem:[%s223 + $0x30] sm:$0xff]
        %v235 = vld [vmem:[%s223 + $0x38] sm:$0xff]
        %v236 = vld [vmem:[%s223 + $0x40] sm:$0xff]
        %v237 = vld [vmem:[%s223 + $0x48] sm:$0xff]
        %v238 = vld [vmem:[%s223 + $0x50] sm:$0xff]
        %v239 = vld [vmem:[%s223 + $0x58] sm:$0xff]
        %v240 = vld [vmem:[%s223 + $0x60] sm:$0xff]
        %v241 = vld [vmem:[%s223 + $0x68] sm:$0xff]
        %v242 = vld [vmem:[%s223 + $0x70] sm:$0xff]
        %v243 = vld [vmem:[%s223 + $0x78] sm:$0xff]
        %v244 = vld [vmem:[%s223 + $0x80] sm:$0xff]
        %v245 = vld [vmem:[%s223 + $0x88] sm:$0xff]
        %v246 = vld [vmem:[%s223 + $0x90] sm:$0xff]
        %v247 = vld [vmem:[%s223 + $0x98] sm:$0xff]
        %v248 = vld [vmem:[%s223 + $0xa0] sm:$0xff]
        %v249 = vld [vmem:[%s223 + $0xa8] sm:$0xff]
        %v250 = vld [vmem:[%s223 + $0xb0] sm:$0xff]
        %v251 = vld [vmem:[%s223 + $0xb8] sm:$0xff]
        %v252 = vld [vmem:[%s223 + $0xc0] sm:$0xff]
        %v253 = vld [vmem:[%s223 + $0xc8] sm:$0xff]
        %v254 = vld [vmem:[%s223 + $0xd0] sm:$0xff]
        %v255 = vld [vmem:[%s223 + $0xd8] sm:$0xff]
        %v256 = vld [vmem:[%s223 + $0xe0] sm:$0xff]
        %v257 = vld [vmem:[%s223 + $0xe8] sm:$0xff]
        %v258 = vld [vmem:[%s223 + $0xf0] sm:$0xff]
        %v259 = vld [vmem:[%s223 + $0xf8] sm:$0xff]
        %260 = vset.pattern.permute.xlu0 0
        %261 = vperm.xlu0 %260, %v228
        %v262 = vpop.permute.xlu0 %261
        %263 = vset.pattern.permute.xlu0 0
        %264 = vperm.xlu0 %263, %v229
        %v265 = vpop.permute.xlu0 %264
        %266 = vset.pattern.permute.xlu0 0
        %267 = vperm.xlu0 %266, %v230
        %v268 = vpop.permute.xlu0 %267
        %269 = vset.pattern.permute.xlu0 0
        %270 = vperm.xlu0 %269, %v231
        %v271 = vpop.permute.xlu0 %270
        %272 = vset.pattern.permute.xlu0 0
        %273 = vperm.xlu0 %272, %v232
        %v274 = vpop.permute.xlu0 %273
        %275 = vset.pattern.permute.xlu0 0
        %276 = vperm.xlu0 %275, %v233
        %v277 = vpop.permute.xlu0 %276
        %278 = vset.pattern.permute.xlu0 0
        %279 = vperm.xlu0 %278, %v234
        %v280 = vpop.permute.xlu0 %279
        %281 = vset.pattern.permute.xlu0 0
        %282 = vperm.xlu0 %281, %v235
        %v283 = vpop.permute.xlu0 %282
        %284 = vset.pattern.permute.xlu0 0
        %285 = vperm.xlu0 %284, %v236
        %v286 = vpop.permute.xlu0 %285
        %287 = vset.pattern.permute.xlu0 0
        %288 = vperm.xlu0 %287, %v237
        %v289 = vpop.permute.xlu0 %288
        %290 = vset.pattern.permute.xlu0 0
        %291 = vperm.xlu0 %290, %v238
        %v292 = vpop.permute.xlu0 %291
        %293 = vset.pattern.permute.xlu0 0
        %294 = vperm.xlu0 %293, %v239
        %v295 = vpop.permute.xlu0 %294
        %296 = vset.pattern.permute.xlu0 0
        %297 = vperm.xlu0 %296, %v240
        %v298 = vpop.permute.xlu0 %297
        %299 = vset.pattern.permute.xlu0 0
        %300 = vperm.xlu0 %299, %v241
        %v301 = vpop.permute.xlu0 %300
        %302 = vset.pattern.permute.xlu0 0
        %303 = vperm.xlu0 %302, %v242
        %v304 = vpop.permute.xlu0 %303
        %305 = vset.pattern.permute.xlu0 0
        %306 = vperm.xlu0 %305, %v243
        %v307 = vpop.permute.xlu0 %306
        %308 = vset.pattern.permute.xlu0 0
        %309 = vperm.xlu0 %308, %v244
        %v310 = vpop.permute.xlu0 %309
        %311 = vset.pattern.permute.xlu0 0
        %312 = vperm.xlu0 %311, %v245
        %v313 = vpop.permute.xlu0 %312
        %314 = vset.pattern.permute.xlu0 0
        %315 = vperm.xlu0 %314, %v246
        %v316 = vpop.permute.xlu0 %315
        %317 = vset.pattern.permute.xlu0 0
        %318 = vperm.xlu0 %317, %v247
        %v319 = vpop.permute.xlu0 %318
        %320 = vset.pattern.permute.xlu0 0
        %321 = vperm.xlu0 %320, %v248
        %v322 = vpop.permute.xlu0 %321
        %323 = vset.pattern.permute.xlu0 0
        %324 = vperm.xlu0 %323, %v249
        %v325 = vpop.permute.xlu0 %324
        %326 = vset.pattern.permute.xlu0 0
        %327 = vperm.xlu0 %326, %v250
        %v328 = vpop.permute.xlu0 %327
        %329 = vset.pattern.permute.xlu0 0
        %330 = vperm.xlu0 %329, %v251
        %v331 = vpop.permute.xlu0 %330
        %332 = vset.pattern.permute.xlu0 0
        %333 = vperm.xlu0 %332, %v252
        %v334 = vpop.permute.xlu0 %333
        %335 = vset.pattern.permute.xlu0 0
        %336 = vperm.xlu0 %335, %v253
        %v337 = vpop.permute.xlu0 %336
        %338 = vset.pattern.permute.xlu0 0
        %339 = vperm.xlu0 %338, %v254
        %v340 = vpop.permute.xlu0 %339
        %341 = vset.pattern.permute.xlu0 0
        %342 = vperm.xlu0 %341, %v255
        %v343 = vpop.permute.xlu0 %342
        %344 = vset.pattern.permute.xlu0 0
        %345 = vperm.xlu0 %344, %v256
        %v346 = vpop.permute.xlu0 %345
        %347 = vset.pattern.permute.xlu0 0
        %348 = vperm.xlu0 %347, %v257
        %v349 = vpop.permute.xlu0 %348
        %350 = vset.pattern.permute.xlu0 0
        %351 = vperm.xlu0 %350, %v258
        %v352 = vpop.permute.xlu0 %351
        %353 = vset.pattern.permute.xlu0 0
        %354 = vperm.xlu0 %353, %v259
        %v355 = vpop.permute.xlu0 %354
        %vm356 = vcmp.eq.s32.totalorder %v227, %v262
        %vm357 = vcmp.eq.s32.totalorder %v227, %v265
        %vm358 = vcmp.eq.s32.totalorder %v227, %v268
        %vm359 = vcmp.eq.s32.totalorder %v227, %v271
        %vm360 = vcmp.eq.s32.totalorder %v227, %v274
        %vm361 = vcmp.eq.s32.totalorder %v227, %v277
        %vm362 = vcmp.eq.s32.totalorder %v227, %v280
        %vm363 = vcmp.eq.s32.totalorder %v227, %v283
        %vm364 = vcmp.eq.s32.totalorder %v227, %v286
        %vm365 = vcmp.eq.s32.totalorder %v227, %v289
        %vm366 = vcmp.eq.s32.totalorder %v227, %v292
        %vm367 = vcmp.eq.s32.totalorder %v227, %v295
        %vm368 = vcmp.eq.s32.totalorder %v227, %v298
        %vm369 = vcmp.eq.s32.totalorder %v227, %v301
        %vm370 = vcmp.eq.s32.totalorder %v227, %v304
        %vm371 = vcmp.eq.s32.totalorder %v227, %v307
        %vm372 = vcmp.eq.s32.totalorder %v227, %v310
        %vm373 = vcmp.eq.s32.totalorder %v227, %v313
        %vm374 = vcmp.eq.s32.totalorder %v227, %v316
        %vm375 = vcmp.eq.s32.totalorder %v227, %v319
        %vm376 = vcmp.eq.s32.totalorder %v227, %v322
        %vm377 = vcmp.eq.s32.totalorder %v227, %v325
        %vm378 = vcmp.eq.s32.totalorder %v227, %v328
        %vm379 = vcmp.eq.s32.totalorder %v227, %v331
        %vm380 = vcmp.eq.s32.totalorder %v227, %v334
        %vm381 = vcmp.eq.s32.totalorder %v227, %v337
        %vm382 = vcmp.eq.s32.totalorder %v227, %v340
        %vm383 = vcmp.eq.s32.totalorder %v227, %v343
        %vm384 = vcmp.eq.s32.totalorder %v227, %v346
        %vm385 = vcmp.eq.s32.totalorder %v227, %v349
        %vm386 = vcmp.eq.s32.totalorder %v227, %v352
        %vm387 = vcmp.eq.s32.totalorder %v227, %v355
        %v388 = vsel %vm356, 1, 0
        %v389 = vsel %vm357, 1, 0
        %v390 = vsel %vm358, 1, 0
        %v391 = vsel %vm359, 1, 0
        %v392 = vsel %vm360, 1, 0
        %v393 = vsel %vm361, 1, 0
        %v394 = vsel %vm362, 1, 0
        %v395 = vsel %vm363, 1, 0
        %v396 = vsel %vm364, 1, 0
        %v397 = vsel %vm365, 1, 0
        %v398 = vsel %vm366, 1, 0
        %v399 = vsel %vm367, 1, 0
        %v400 = vsel %vm368, 1, 0
        %v401 = vsel %vm369, 1, 0
        %v402 = vsel %vm370, 1, 0
        %v403 = vsel %vm371, 1, 0
        %v404 = vsel %vm372, 1, 0
        %v405 = vsel %vm373, 1, 0
        %v406 = vsel %vm374, 1, 0
        %v407 = vsel %vm375, 1, 0
        %v408 = vsel %vm376, 1, 0
        %v409 = vsel %vm377, 1, 0
        %v410 = vsel %vm378, 1, 0
        %v411 = vsel %vm379, 1, 0
        %v412 = vsel %vm380, 1, 0
        %v413 = vsel %vm381, 1, 0
        %v414 = vsel %vm382, 1, 0
        %v415 = vsel %vm383, 1, 0
        %v416 = vsel %vm384, 1, 0
        %v417 = vsel %vm385, 1, 0
        %v418 = vsel %vm386, 1, 0
        %v419 = vsel %vm387, 1, 0
        %v420 = vcvt.s32.f32 %v388
        %v421 = vcvt.s32.f32 %v389
        %v422 = vcvt.s32.f32 %v390
        %v423 = vcvt.s32.f32 %v391
        %v424 = vcvt.s32.f32 %v392
        %v425 = vcvt.s32.f32 %v393
        %v426 = vcvt.s32.f32 %v394
        %v427 = vcvt.s32.f32 %v395
        %v428 = vcvt.s32.f32 %v396
        %v429 = vcvt.s32.f32 %v397
        %v430 = vcvt.s32.f32 %v398
        %v431 = vcvt.s32.f32 %v399
        %v432 = vcvt.s32.f32 %v400
        %v433 = vcvt.s32.f32 %v401
        %v434 = vcvt.s32.f32 %v402
        %v435 = vcvt.s32.f32 %v403
        %v436 = vcvt.s32.f32 %v404
        %v437 = vcvt.s32.f32 %v405
        %v438 = vcvt.s32.f32 %v406
        %v439 = vcvt.s32.f32 %v407
        %v440 = vcvt.s32.f32 %v408
        %v441 = vcvt.s32.f32 %v409
        %v442 = vcvt.s32.f32 %v410
        %v443 = vcvt.s32.f32 %v411
        %v444 = vcvt.s32.f32 %v412
        %v445 = vcvt.s32.f32 %v413
        %v446 = vcvt.s32.f32 %v414
        %v447 = vcvt.s32.f32 %v415
        %v448 = vcvt.s32.f32 %v416
        %v449 = vcvt.s32.f32 %v417
        %v450 = vcvt.s32.f32 %v418
        %v451 = vcvt.s32.f32 %v419
        %v452 = vpack.c.bf16 %v420, %v420
        %v453 = vpack.c.bf16 %v421, %v421
        %v454 = vpack.c.bf16 %v422, %v422
        %v455 = vpack.c.bf16 %v423, %v423
        %v456 = vpack.c.bf16 %v424, %v424
        %v457 = vpack.c.bf16 %v425, %v425
        %v458 = vpack.c.bf16 %v426, %v426
        %v459 = vpack.c.bf16 %v427, %v427
        %v460 = vpack.c.bf16 %v428, %v428
        %v461 = vpack.c.bf16 %v429, %v429
        %v462 = vpack.c.bf16 %v430, %v430
        %v463 = vpack.c.bf16 %v431, %v431
        %v464 = vpack.c.bf16 %v432, %v432
        %v465 = vpack.c.bf16 %v433, %v433
        %v466 = vpack.c.bf16 %v434, %v434
        %v467 = vpack.c.bf16 %v435, %v435
        %v468 = vpack.c.bf16 %v436, %v436
        %v469 = vpack.c.bf16 %v437, %v437
        %v470 = vpack.c.bf16 %v438, %v438
        %v471 = vpack.c.bf16 %v439, %v439
        %v472 = vpack.c.bf16 %v440, %v440
        %v473 = vpack.c.bf16 %v441, %v441
        %v474 = vpack.c.bf16 %v442, %v442
        %v475 = vpack.c.bf16 %v443, %v443
        %v476 = vpack.c.bf16 %v444, %v444
        %v477 = vpack.c.bf16 %v445, %v445
        %v478 = vpack.c.bf16 %v446, %v446
        %v479 = vpack.c.bf16 %v447, %v447
        %v480 = vpack.c.bf16 %v448, %v448
        %v481 = vpack.c.bf16 %v449, %v449
        %v482 = vpack.c.bf16 %v450, %v450
        %v483 = vpack.c.bf16 %v451, %v451
        %484 = vst [vmem:[#allocation2] sm:$0xf] %v452
        %485 = vst [vmem:[#allocation2 + $0xc] sm:$0xf] %v453
        %486 = vst [vmem:[#allocation2 + $0x18] sm:$0xf] %v454
        %487 = vst [vmem:[#allocation2 + $0x24] sm:$0xf] %v455
        %488 = vst [vmem:[#allocation2 + $0x30] sm:$0xf] %v456
        %489 = vst [vmem:[#allocation2 + $0x3c] sm:$0xf] %v457
        %490 = vst [vmem:[#allocation2 + $0x48] sm:$0xf] %v458
        %491 = vst [vmem:[#allocation2 + $0x54] sm:$0xf] %v459
        %492 = vst [vmem:[#allocation2 + $0x60] sm:$0xf] %v460
        %493 = vst [vmem:[#allocation2 + $0x6c] sm:$0xf] %v461
        %494 = vst [vmem:[#allocation2 + $0x78] sm:$0xf] %v462
        %495 = vst [vmem:[#allocation2 + $0x84] sm:$0xf] %v463
        %496 = vst [vmem:[#allocation2 + $0x90] sm:$0xf] %v464
        %497 = vst [vmem:[#allocation2 + $0x9c] sm:$0xf] %v465
        %498 = vst [vmem:[#allocation2 + $0xa8] sm:$0xf] %v466
        %499 = vst [vmem:[#allocation2 + $0xb4] sm:$0xf] %v467
        %500 = vst [vmem:[#allocation2 + $0xc0] sm:$0xf] %v468
        %501 = vst [vmem:[#allocation2 + $0xcc] sm:$0xf] %v469
        %502 = vst [vmem:[#allocation2 + $0xd8] sm:$0xf] %v470
        %503 = vst [vmem:[#allocation2 + $0xe4] sm:$0xf] %v471
        %504 = vst [vmem:[#allocation2 + $0xf0] sm:$0xf] %v472
        %505 = vst [vmem:[#allocation2 + $0xfc] sm:$0xf] %v473
        %506 = vst [vmem:[#allocation2 + $0x108] sm:$0xf] %v474
        %507 = vst [vmem:[#allocation2 + $0x114] sm:$0xf] %v475
        %508 = vst [vmem:[#allocation2 + $0x120] sm:$0xf] %v476
        %509 = vst [vmem:[#allocation2 + $0x12c] sm:$0xf] %v477
        %510 = vst [vmem:[#allocation2 + $0x138] sm:$0xf] %v478
        %511 = vst [vmem:[#allocation2 + $0x144] sm:$0xf] %v479
        %512 = vst [vmem:[#allocation2 + $0x150] sm:$0xf] %v480
        %513 = vst [vmem:[#allocation2 + $0x15c] sm:$0xf] %v481
        %514 = vst [vmem:[#allocation2 + $0x168] sm:$0xf] %v482
        %515 = vst [vmem:[#allocation2 + $0x174] sm:$0xf] %v483
        %v516 = vld [vmem:[%s223] sm:$0xff]
        %v517 = vld [vmem:[%s223 + $0x8] sm:$0xff]
        %v518 = vld [vmem:[%s223 + $0x10] sm:$0xff]
        %v519 = vld [vmem:[%s223 + $0x18] sm:$0xff]
        %v520 = vld [vmem:[%s223 + $0x20] sm:$0xff]
        %v521 = vld [vmem:[%s223 + $0x28] sm:$0xff]
        %v522 = vld [vmem:[%s223 + $0x30] sm:$0xff]
        %v523 = vld [vmem:[%s223 + $0x38] sm:$0xff]
        %v524 = vld [vmem:[%s223 + $0x40] sm:$0xff]
        %v525 = vld [vmem:[%s223 + $0x48] sm:$0xff]
        %v526 = vld [vmem:[%s223 + $0x50] sm:$0xff]
        %v527 = vld [vmem:[%s223 + $0x58] sm:$0xff]
        %v528 = vld [vmem:[%s223 + $0x60] sm:$0xff]
        %v529 = vld [vmem:[%s223 + $0x68] sm:$0xff]
        %v530 = vld [vmem:[%s223 + $0x70] sm:$0xff]
        %v531 = vld [vmem:[%s223 + $0x78] sm:$0xff]
        %v532 = vld [vmem:[%s223 + $0x80] sm:$0xff]
        %v533 = vld [vmem:[%s223 + $0x88] sm:$0xff]
        %v534 = vld [vmem:[%s223 + $0x90] sm:$0xff]
        %v535 = vld [vmem:[%s223 + $0x98] sm:$0xff]
        %v536 = vld [vmem:[%s223 + $0xa0] sm:$0xff]
        %v537 = vld [vmem:[%s223 + $0xa8] sm:$0xff]
        %v538 = vld [vmem:[%s223 + $0xb0] sm:$0xff]
        %v539 = vld [vmem:[%s223 + $0xb8] sm:$0xff]
        %v540 = vld [vmem:[%s223 + $0xc0] sm:$0xff]
        %v541 = vld [vmem:[%s223 + $0xc8] sm:$0xff]
        %v542 = vld [vmem:[%s223 + $0xd0] sm:$0xff]
        %v543 = vld [vmem:[%s223 + $0xd8] sm:$0xff]
        %v544 = vld [vmem:[%s223 + $0xe0] sm:$0xff]
        %v545 = vld [vmem:[%s223 + $0xe8] sm:$0xff]
        %v546 = vld [vmem:[%s223 + $0xf0] sm:$0xff]
        %v547 = vld [vmem:[%s223 + $0xf8] sm:$0xff]
        %548 = vset.pattern.permute.xlu0 1
        %549 = vperm.xlu0 %548, %v516
        %v550 = vpop.permute.xlu0 %549
        %551 = vset.pattern.permute.xlu0 1
        %552 = vperm.xlu0 %551, %v517
        %v553 = vpop.permute.xlu0 %552
        %554 = vset.pattern.permute.xlu0 1
        %555 = vperm.xlu0 %554, %v518
        %v556 = vpop.permute.xlu0 %555
        %557 = vset.pattern.permute.xlu0 1
        %558 = vperm.xlu0 %557, %v519
        %v559 = vpop.permute.xlu0 %558
        %560 = vset.pattern.permute.xlu0 1
        %561 = vperm.xlu0 %560, %v520
        %v562 = vpop.permute.xlu0 %561
        %563 = vset.pattern.permute.xlu0 1
        %564 = vperm.xlu0 %563, %v521
        %v565 = vpop.permute.xlu0 %564
        %566 = vset.pattern.permute.xlu0 1
        %567 = vperm.xlu0 %566, %v522
        %v568 = vpop.permute.xlu0 %567
        %569 = vset.pattern.permute.xlu0 1
        %570 = vperm.xlu0 %569, %v523
        %v571 = vpop.permute.xlu0 %570
        %572 = vset.pattern.permute.xlu0 1
        %573 = vperm.xlu0 %572, %v524
        %v574 = vpop.permute.xlu0 %573
        %575 = vset.pattern.permute.xlu0 1
        %576 = vperm.xlu0 %575, %v525
        %v577 = vpop.permute.xlu0 %576
        %578 = vset.pattern.permute.xlu0 1
        %579 = vperm.xlu0 %578, %v526
        %v580 = vpop.permute.xlu0 %579
        %581 = vset.pattern.permute.xlu0 1
        %582 = vperm.xlu0 %581, %v527
        %v583 = vpop.permute.xlu0 %582
        %584 = vset.pattern.permute.xlu0 1
        %585 = vperm.xlu0 %584, %v528
        %v586 = vpop.permute.xlu0 %585
        %587 = vset.pattern.permute.xlu0 1
        %588 = vperm.xlu0 %587, %v529
        %v589 = vpop.permute.xlu0 %588
        %590 = vset.pattern.permute.xlu0 1
        %591 = vperm.xlu0 %590, %v530
        %v592 = vpop.permute.xlu0 %591
        %593 = vset.pattern.permute.xlu0 1
        %594 = vperm.xlu0 %593, %v531
        %v595 = vpop.permute.xlu0 %594
        %596 = vset.pattern.permute.xlu0 1
        %597 = vperm.xlu0 %596, %v532
        %v598 = vpop.permute.xlu0 %597
        %599 = vset.pattern.permute.xlu0 1
        %600 = vperm.xlu0 %599, %v533
        %v601 = vpop.permute.xlu0 %600
        %602 = vset.pattern.permute.xlu0 1
        %603 = vperm.xlu0 %602, %v534
        %v604 = vpop.permute.xlu0 %603
        %605 = vset.pattern.permute.xlu0 1
        %606 = vperm.xlu0 %605, %v535
        %v607 = vpop.permute.xlu0 %606
        %608 = vset.pattern.permute.xlu0 1
        %609 = vperm.xlu0 %608, %v536
        %v610 = vpop.permute.xlu0 %609
        %611 = vset.pattern.permute.xlu0 1
        %612 = vperm.xlu0 %611, %v537
        %v613 = vpop.permute.xlu0 %612
        %614 = vset.pattern.permute.xlu0 1
        %615 = vperm.xlu0 %614, %v538
        %v616 = vpop.permute.xlu0 %615
        %617 = vset.pattern.permute.xlu0 1
        %618 = vperm.xlu0 %617, %v539
        %v619 = vpop.permute.xlu0 %618
        %620 = vset.pattern.permute.xlu0 1
        %621 = vperm.xlu0 %620, %v540
        %v622 = vpop.permute.xlu0 %621
        %623 = vset.pattern.permute.xlu0 1
        %624 = vperm.xlu0 %623, %v541
        %v625 = vpop.permute.xlu0 %624
        %626 = vset.pattern.permute.xlu0 1
        %627 = vperm.xlu0 %626, %v542
        %v628 = vpop.permute.xlu0 %627
        %629 = vset.pattern.permute.xlu0 1
        %630 = vperm.xlu0 %629, %v543
        %v631 = vpop.permute.xlu0 %630
        %632 = vset.pattern.permute.xlu0 1
        %633 = vperm.xlu0 %632, %v544
        %v634 = vpop.permute.xlu0 %633
        %635 = vset.pattern.permute.xlu0 1
        %636 = vperm.xlu0 %635, %v545
        %v637 = vpop.permute.xlu0 %636
        %638 = vset.pattern.permute.xlu0 1
        %639 = vperm.xlu0 %638, %v546
        %v640 = vpop.permute.xlu0 %639
        %641 = vset.pattern.permute.xlu0 1
        %642 = vperm.xlu0 %641, %v547
        %v643 = vpop.permute.xlu0 %642
        %vm644 = vcmp.eq.s32.totalorder %v227, %v550
        %vm645 = vcmp.eq.s32.totalorder %v227, %v553
        %vm646 = vcmp.eq.s32.totalorder %v227, %v556
        %vm647 = vcmp.eq.s32.totalorder %v227, %v559
        %vm648 = vcmp.eq.s32.totalorder %v227, %v562
        %vm649 = vcmp.eq.s32.totalorder %v227, %v565
        %vm650 = vcmp.eq.s32.totalorder %v227, %v568
        %vm651 = vcmp.eq.s32.totalorder %v227, %v571
        %vm652 = vcmp.eq.s32.totalorder %v227, %v574
        %vm653 = vcmp.eq.s32.totalorder %v227, %v577
        %vm654 = vcmp.eq.s32.totalorder %v227, %v580
        %vm655 = vcmp.eq.s32.totalorder %v227, %v583
        %vm656 = vcmp.eq.s32.totalorder %v227, %v586
        %vm657 = vcmp.eq.s32.totalorder %v227, %v589
        %vm658 = vcmp.eq.s32.totalorder %v227, %v592
        %vm659 = vcmp.eq.s32.totalorder %v227, %v595
        %vm660 = vcmp.eq.s32.totalorder %v227, %v598
        %vm661 = vcmp.eq.s32.totalorder %v227, %v601
        %vm662 = vcmp.eq.s32.totalorder %v227, %v604
        %vm663 = vcmp.eq.s32.totalorder %v227, %v607
        %vm664 = vcmp.eq.s32.totalorder %v227, %v610
        %vm665 = vcmp.eq.s32.totalorder %v227, %v613
        %vm666 = vcmp.eq.s32.totalorder %v227, %v616
        %vm667 = vcmp.eq.s32.totalorder %v227, %v619
        %vm668 = vcmp.eq.s32.totalorder %v227, %v622
        %vm669 = vcmp.eq.s32.totalorder %v227, %v625
        %vm670 = vcmp.eq.s32.totalorder %v227, %v628
        %vm671 = vcmp.eq.s32.totalorder %v227, %v631
        %vm672 = vcmp.eq.s32.totalorder %v227, %v634
        %vm673 = vcmp.eq.s32.totalorder %v227, %v637
        %vm674 = vcmp.eq.s32.totalorder %v227, %v640
        %vm675 = vcmp.eq.s32.totalorder %v227, %v643
        %v676 = vsel %vm644, 1, 0
        %v677 = vsel %vm645, 1, 0
        %v678 = vsel %vm646, 1, 0
        %v679 = vsel %vm647, 1, 0
        %v680 = vsel %vm648, 1, 0
        %v681 = vsel %vm649, 1, 0
        %v682 = vsel %vm650, 1, 0
        %v683 = vsel %vm651, 1, 0
        %v684 = vsel %vm652, 1, 0
        %v685 = vsel %vm653, 1, 0
        %v686 = vsel %vm654, 1, 0
        %v687 = vsel %vm655, 1, 0
        %v688 = vsel %vm656, 1, 0
        %v689 = vsel %vm657, 1, 0
        %v690 = vsel %vm658, 1, 0
        %v691 = vsel %vm659, 1, 0
        %v692 = vsel %vm660, 1, 0
        %v693 = vsel %vm661, 1, 0
        %v694 = vsel %vm662, 1, 0
        %v695 = vsel %vm663, 1, 0
        %v696 = vsel %vm664, 1, 0
        %v697 = vsel %vm665, 1, 0
        %v698 = vsel %vm666, 1, 0
        %v699 = vsel %vm667, 1, 0
        %v700 = vsel %vm668, 1, 0
        %v701 = vsel %vm669, 1, 0
        %v702 = vsel %vm670, 1, 0
        %v703 = vsel %vm671, 1, 0
        %v704 = vsel %vm672, 1, 0
        %v705 = vsel %vm673, 1, 0
        %v706 = vsel %vm674, 1, 0
        %v707 = vsel %vm675, 1, 0
        %v708 = vcvt.s32.f32 %v676
        %v709 = vcvt.s32.f32 %v677
        %v710 = vcvt.s32.f32 %v678
        %v711 = vcvt.s32.f32 %v679
        %v712 = vcvt.s32.f32 %v680
        %v713 = vcvt.s32.f32 %v681
        %v714 = vcvt.s32.f32 %v682
        %v715 = vcvt.s32.f32 %v683
        %v716 = vcvt.s32.f32 %v684
        %v717 = vcvt.s32.f32 %v685
        %v718 = vcvt.s32.f32 %v686
        %v719 = vcvt.s32.f32 %v687
        %v720 = vcvt.s32.f32 %v688
        %v721 = vcvt.s32.f32 %v689
        %v722 = vcvt.s32.f32 %v690
        %v723 = vcvt.s32.f32 %v691
        %v724 = vcvt.s32.f32 %v692
        %v725 = vcvt.s32.f32 %v693
        %v726 = vcvt.s32.f32 %v694
        %v727 = vcvt.s32.f32 %v695
        %v728 = vcvt.s32.f32 %v696
        %v729 = vcvt.s32.f32 %v697
        %v730 = vcvt.s32.f32 %v698
        %v731 = vcvt.s32.f32 %v699
        %v732 = vcvt.s32.f32 %v700
        %v733 = vcvt.s32.f32 %v701
        %v734 = vcvt.s32.f32 %v702
        %v735 = vcvt.s32.f32 %v703
        %v736 = vcvt.s32.f32 %v704
        %v737 = vcvt.s32.f32 %v705
        %v738 = vcvt.s32.f32 %v706
        %v739 = vcvt.s32.f32 %v707
        %v740 = vpack.c.bf16 %v708, %v708
        %v741 = vpack.c.bf16 %v709, %v709
        %v742 = vpack.c.bf16 %v710, %v710
        %v743 = vpack.c.bf16 %v711, %v711
        %v744 = vpack.c.bf16 %v712, %v712
        %v745 = vpack.c.bf16 %v713, %v713
        %v746 = vpack.c.bf16 %v714, %v714
        %v747 = vpack.c.bf16 %v715, %v715
        %v748 = vpack.c.bf16 %v716, %v716
        %v749 = vpack.c.bf16 %v717, %v717
        %v750 = vpack.c.bf16 %v718, %v718
        %v751 = vpack.c.bf16 %v719, %v719
        %v752 = vpack.c.bf16 %v720, %v720
        %v753 = vpack.c.bf16 %v721, %v721
        %v754 = vpack.c.bf16 %v722, %v722
        %v755 = vpack.c.bf16 %v723, %v723
        %v756 = vpack.c.bf16 %v724, %v724
        %v757 = vpack.c.bf16 %v725, %v725
        %v758 = vpack.c.bf16 %v726, %v726
        %v759 = vpack.c.bf16 %v727, %v727
        %v760 = vpack.c.bf16 %v728, %v728
        %v761 = vpack.c.bf16 %v729, %v729
        %v762 = vpack.c.bf16 %v730, %v730
        %v763 = vpack.c.bf16 %v731, %v731
        %v764 = vpack.c.bf16 %v732, %v732
        %v765 = vpack.c.bf16 %v733, %v733
        %v766 = vpack.c.bf16 %v734, %v734
        %v767 = vpack.c.bf16 %v735, %v735
        %v768 = vpack.c.bf16 %v736, %v736
        %v769 = vpack.c.bf16 %v737, %v737
        %v770 = vpack.c.bf16 %v738, %v738
        %v771 = vpack.c.bf16 %v739, %v739
        %772 = vst [vmem:[#allocation2 + $0x4] sm:$0xf] %v740
        %773 = vst [vmem:[#allocation2 + $0x10] sm:$0xf] %v741
        %774 = vst [vmem:[#allocation2 + $0x1c] sm:$0xf] %v742
        %775 = vst [vmem:[#allocation2 + $0x28] sm:$0xf] %v743
        %776 = vst [vmem:[#allocation2 + $0x34] sm:$0xf] %v744
        %777 = vst [vmem:[#allocation2 + $0x40] sm:$0xf] %v745
        %778 = vst [vmem:[#allocation2 + $0x4c] sm:$0xf] %v746
        %779 = vst [vmem:[#allocation2 + $0x58] sm:$0xf] %v747
        %780 = vst [vmem:[#allocation2 + $0x64] sm:$0xf] %v748
        %781 = vst [vmem:[#allocation2 + $0x70] sm:$0xf] %v749
        %782 = vst [vmem:[#allocation2 + $0x7c] sm:$0xf] %v750
        %783 = vst [vmem:[#allocation2 + $0x88] sm:$0xf] %v751
        %784 = vst [vmem:[#allocation2 + $0x94] sm:$0xf] %v752
        %785 = vst [vmem:[#allocation2 + $0xa0] sm:$0xf] %v753
        %786 = vst [vmem:[#allocation2 + $0xac] sm:$0xf] %v754
        %787 = vst [vmem:[#allocation2 + $0xb8] sm:$0xf] %v755
        %788 = vst [vmem:[#allocation2 + $0xc4] sm:$0xf] %v756
        %789 = vst [vmem:[#allocation2 + $0xd0] sm:$0xf] %v757
        %790 = vst [vmem:[#allocation2 + $0xdc] sm:$0xf] %v758
        %791 = vst [vmem:[#allocation2 + $0xe8] sm:$0xf] %v759
        %792 = vst [vmem:[#allocation2 + $0xf4] sm:$0xf] %v760
        %793 = vst [vmem:[#allocation2 + $0x100] sm:$0xf] %v761
        %794 = vst [vmem:[#allocation2 + $0x10c] sm:$0xf] %v762
        %795 = vst [vmem:[#allocation2 + $0x118] sm:$0xf] %v763
        %796 = vst [vmem:[#allocation2 + $0x124] sm:$0xf] %v764
        %797 = vst [vmem:[#allocation2 + $0x130] sm:$0xf] %v765
        %798 = vst [vmem:[#allocation2 + $0x13c] sm:$0xf] %v766
        %799 = vst [vmem:[#allocation2 + $0x148] sm:$0xf] %v767
        %800 = vst [vmem:[#allocation2 + $0x154] sm:$0xf] %v768
        %801 = vst [vmem:[#allocation2 + $0x160] sm:$0xf] %v769
        %802 = vst [vmem:[#allocation2 + $0x16c] sm:$0xf] %v770
        %803 = vst [vmem:[#allocation2 + $0x178] sm:$0xf] %v771
        %v804 = vld [vmem:[%s223] sm:$0xff]
        %v805 = vld [vmem:[%s223 + $0x8] sm:$0xff]
        %v806 = vld [vmem:[%s223 + $0x10] sm:$0xff]
        %v807 = vld [vmem:[%s223 + $0x18] sm:$0xff]
        %v808 = vld [vmem:[%s223 + $0x20] sm:$0xff]
        %v809 = vld [vmem:[%s223 + $0x28] sm:$0xff]
        %v810 = vld [vmem:[%s223 + $0x30] sm:$0xff]
        %v811 = vld [vmem:[%s223 + $0x38] sm:$0xff]
        %v812 = vld [vmem:[%s223 + $0x40] sm:$0xff]
        %v813 = vld [vmem:[%s223 + $0x48] sm:$0xff]
        %v814 = vld [vmem:[%s223 + $0x50] sm:$0xff]
        %v815 = vld [vmem:[%s223 + $0x58] sm:$0xff]
        %v816 = vld [vmem:[%s223 + $0x60] sm:$0xff]
        %v817 = vld [vmem:[%s223 + $0x68] sm:$0xff]
        %v818 = vld [vmem:[%s223 + $0x70] sm:$0xff]
        %v819 = vld [vmem:[%s223 + $0x78] sm:$0xff]
        %v820 = vld [vmem:[%s223 + $0x80] sm:$0xff]
        %v821 = vld [vmem:[%s223 + $0x88] sm:$0xff]
        %v822 = vld [vmem:[%s223 + $0x90] sm:$0xff]
        %v823 = vld [vmem:[%s223 + $0x98] sm:$0xff]
        %v824 = vld [vmem:[%s223 + $0xa0] sm:$0xff]
        %v825 = vld [vmem:[%s223 + $0xa8] sm:$0xff]
        %v826 = vld [vmem:[%s223 + $0xb0] sm:$0xff]
        %v827 = vld [vmem:[%s223 + $0xb8] sm:$0xff]
        %v828 = vld [vmem:[%s223 + $0xc0] sm:$0xff]
        %v829 = vld [vmem:[%s223 + $0xc8] sm:$0xff]
        %v830 = vld [vmem:[%s223 + $0xd0] sm:$0xff]
        %v831 = vld [vmem:[%s223 + $0xd8] sm:$0xff]
        %v832 = vld [vmem:[%s223 + $0xe0] sm:$0xff]
        %v833 = vld [vmem:[%s223 + $0xe8] sm:$0xff]
        %v834 = vld [vmem:[%s223 + $0xf0] sm:$0xff]
        %v835 = vld [vmem:[%s223 + $0xf8] sm:$0xff]
        %836 = vset.pattern.permute.xlu0 2
        %837 = vperm.xlu0 %836, %v804
        %v838 = vpop.permute.xlu0 %837
        %839 = vset.pattern.permute.xlu0 2
        %840 = vperm.xlu0 %839, %v805
        %v841 = vpop.permute.xlu0 %840
        %842 = vset.pattern.permute.xlu0 2
        %843 = vperm.xlu0 %842, %v806
        %v844 = vpop.permute.xlu0 %843
        %845 = vset.pattern.permute.xlu0 2
        %846 = vperm.xlu0 %845, %v807
        %v847 = vpop.permute.xlu0 %846
        %848 = vset.pattern.permute.xlu0 2
        %849 = vperm.xlu0 %848, %v808
        %v850 = vpop.permute.xlu0 %849
        %851 = vset.pattern.permute.xlu0 2
        %852 = vperm.xlu0 %851, %v809
        %v853 = vpop.permute.xlu0 %852
        %854 = vset.pattern.permute.xlu0 2
        %855 = vperm.xlu0 %854, %v810
        %v856 = vpop.permute.xlu0 %855
        %857 = vset.pattern.permute.xlu0 2
        %858 = vperm.xlu0 %857, %v811
        %v859 = vpop.permute.xlu0 %858
        %860 = vset.pattern.permute.xlu0 2
        %861 = vperm.xlu0 %860, %v812
        %v862 = vpop.permute.xlu0 %861
        %863 = vset.pattern.permute.xlu0 2
        %864 = vperm.xlu0 %863, %v813
        %v865 = vpop.permute.xlu0 %864
        %866 = vset.pattern.permute.xlu0 2
        %867 = vperm.xlu0 %866, %v814
        %v868 = vpop.permute.xlu0 %867
        %869 = vset.pattern.permute.xlu0 2
        %870 = vperm.xlu0 %869, %v815
        %v871 = vpop.permute.xlu0 %870
        %872 = vset.pattern.permute.xlu0 2
        %873 = vperm.xlu0 %872, %v816
        %v874 = vpop.permute.xlu0 %873
        %875 = vset.pattern.permute.xlu0 2
        %876 = vperm.xlu0 %875, %v817
        %v877 = vpop.permute.xlu0 %876
        %878 = vset.pattern.permute.xlu0 2
        %879 = vperm.xlu0 %878, %v818
        %v880 = vpop.permute.xlu0 %879
        %881 = vset.pattern.permute.xlu0 2
        %882 = vperm.xlu0 %881, %v819
        %v883 = vpop.permute.xlu0 %882
        %884 = vset.pattern.permute.xlu0 2
        %885 = vperm.xlu0 %884, %v820
        %v886 = vpop.permute.xlu0 %885
        %887 = vset.pattern.permute.xlu0 2
        %888 = vperm.xlu0 %887, %v821
        %v889 = vpop.permute.xlu0 %888
        %890 = vset.pattern.permute.xlu0 2
        %891 = vperm.xlu0 %890, %v822
        %v892 = vpop.permute.xlu0 %891
        %893 = vset.pattern.permute.xlu0 2
        %894 = vperm.xlu0 %893, %v823
        %v895 = vpop.permute.xlu0 %894
        %896 = vset.pattern.permute.xlu0 2
        %897 = vperm.xlu0 %896, %v824
        %v898 = vpop.permute.xlu0 %897
        %899 = vset.pattern.permute.xlu0 2
        %900 = vperm.xlu0 %899, %v825
        %v901 = vpop.permute.xlu0 %900
        %902 = vset.pattern.permute.xlu0 2
        %903 = vperm.xlu0 %902, %v826
        %v904 = vpop.permute.xlu0 %903
        %905 = vset.pattern.permute.xlu0 2
        %906 = vperm.xlu0 %905, %v827
        %v907 = vpop.permute.xlu0 %906
        %908 = vset.pattern.permute.xlu0 2
        %909 = vperm.xlu0 %908, %v828
        %v910 = vpop.permute.xlu0 %909
        %911 = vset.pattern.permute.xlu0 2
        %912 = vperm.xlu0 %911, %v829
        %v913 = vpop.permute.xlu0 %912
        %914 = vset.pattern.permute.xlu0 2
        %915 = vperm.xlu0 %914, %v830
        %v916 = vpop.permute.xlu0 %915
        %917 = vset.pattern.permute.xlu0 2
        %918 = vperm.xlu0 %917, %v831
        %v919 = vpop.permute.xlu0 %918
        %920 = vset.pattern.permute.xlu0 2
        %921 = vperm.xlu0 %920, %v832
        %v922 = vpop.permute.xlu0 %921
        %923 = vset.pattern.permute.xlu0 2
        %924 = vperm.xlu0 %923, %v833
        %v925 = vpop.permute.xlu0 %924
        %926 = vset.pattern.permute.xlu0 2
        %927 = vperm.xlu0 %926, %v834
        %v928 = vpop.permute.xlu0 %927
        %929 = vset.pattern.permute.xlu0 2
        %930 = vperm.xlu0 %929, %v835
        %v931 = vpop.permute.xlu0 %930
        %vm932 = vcmp.eq.s32.totalorder %v227, %v838
        %vm933 = vcmp.eq.s32.totalorder %v227, %v841
        %vm934 = vcmp.eq.s32.totalorder %v227, %v844
        %vm935 = vcmp.eq.s32.totalorder %v227, %v847
        %vm936 = vcmp.eq.s32.totalorder %v227, %v850
        %vm937 = vcmp.eq.s32.totalorder %v227, %v853
        %vm938 = vcmp.eq.s32.totalorder %v227, %v856
        %vm939 = vcmp.eq.s32.totalorder %v227, %v859
        %vm940 = vcmp.eq.s32.totalorder %v227, %v862
        %vm941 = vcmp.eq.s32.totalorder %v227, %v865
        %vm942 = vcmp.eq.s32.totalorder %v227, %v868
        %vm943 = vcmp.eq.s32.totalorder %v227, %v871
        %vm944 = vcmp.eq.s32.totalorder %v227, %v874
        %vm945 = vcmp.eq.s32.totalorder %v227, %v877
        %vm946 = vcmp.eq.s32.totalorder %v227, %v880
        %vm947 = vcmp.eq.s32.totalorder %v227, %v883
        %vm948 = vcmp.eq.s32.totalorder %v227, %v886
        %vm949 = vcmp.eq.s32.totalorder %v227, %v889
        %vm950 = vcmp.eq.s32.totalorder %v227, %v892
        %vm951 = vcmp.eq.s32.totalorder %v227, %v895
        %vm952 = vcmp.eq.s32.totalorder %v227, %v898
        %vm953 = vcmp.eq.s32.totalorder %v227, %v901
        %vm954 = vcmp.eq.s32.totalorder %v227, %v904
        %vm955 = vcmp.eq.s32.totalorder %v227, %v907
        %vm956 = vcmp.eq.s32.totalorder %v227, %v910
        %vm957 = vcmp.eq.s32.totalorder %v227, %v913
        %vm958 = vcmp.eq.s32.totalorder %v227, %v916
        %vm959 = vcmp.eq.s32.totalorder %v227, %v919
        %vm960 = vcmp.eq.s32.totalorder %v227, %v922
        %vm961 = vcmp.eq.s32.totalorder %v227, %v925
        %vm962 = vcmp.eq.s32.totalorder %v227, %v928
        %vm963 = vcmp.eq.s32.totalorder %v227, %v931
        %v964 = vsel %vm932, 1, 0
        %v965 = vsel %vm933, 1, 0
        %v966 = vsel %vm934, 1, 0
        %v967 = vsel %vm935, 1, 0
        %v968 = vsel %vm936, 1, 0
        %v969 = vsel %vm937, 1, 0
        %v970 = vsel %vm938, 1, 0
        %v971 = vsel %vm939, 1, 0
        %v972 = vsel %vm940, 1, 0
        %v973 = vsel %vm941, 1, 0
        %v974 = vsel %vm942, 1, 0
        %v975 = vsel %vm943, 1, 0
        %v976 = vsel %vm944, 1, 0
        %v977 = vsel %vm945, 1, 0
        %v978 = vsel %vm946, 1, 0
        %v979 = vsel %vm947, 1, 0
        %v980 = vsel %vm948, 1, 0
        %v981 = vsel %vm949, 1, 0
        %v982 = vsel %vm950, 1, 0
        %v983 = vsel %vm951, 1, 0
        %v984 = vsel %vm952, 1, 0
        %v985 = vsel %vm953, 1, 0
        %v986 = vsel %vm954, 1, 0
        %v987 = vsel %vm955, 1, 0
        %v988 = vsel %vm956, 1, 0
        %v989 = vsel %vm957, 1, 0
        %v990 = vsel %vm958, 1, 0
        %v991 = vsel %vm959, 1, 0
        %v992 = vsel %vm960, 1, 0
        %v993 = vsel %vm961, 1, 0
        %v994 = vsel %vm962, 1, 0
        %v995 = vsel %vm963, 1, 0
        %v996 = vcvt.s32.f32 %v964
        %v997 = vcvt.s32.f32 %v965
        %v998 = vcvt.s32.f32 %v966
        %v999 = vcvt.s32.f32 %v967
        %v1000 = vcvt.s32.f32 %v968
        %v1001 = vcvt.s32.f32 %v969
        %v1002 = vcvt.s32.f32 %v970
        %v1003 = vcvt.s32.f32 %v971
        %v1004 = vcvt.s32.f32 %v972
        %v1005 = vcvt.s32.f32 %v973
        %v1006 = vcvt.s32.f32 %v974
        %v1007 = vcvt.s32.f32 %v975
        %v1008 = vcvt.s32.f32 %v976
        %v1009 = vcvt.s32.f32 %v977
        %v1010 = vcvt.s32.f32 %v978
        %v1011 = vcvt.s32.f32 %v979
        %v1012 = vcvt.s32.f32 %v980
        %v1013 = vcvt.s32.f32 %v981
        %v1014 = vcvt.s32.f32 %v982
        %v1015 = vcvt.s32.f32 %v983
        %v1016 = vcvt.s32.f32 %v984
        %v1017 = vcvt.s32.f32 %v985
        %v1018 = vcvt.s32.f32 %v986
        %v1019 = vcvt.s32.f32 %v987
        %v1020 = vcvt.s32.f32 %v988
        %v1021 = vcvt.s32.f32 %v989
        %v1022 = vcvt.s32.f32 %v990
        %v1023 = vcvt.s32.f32 %v991
        %v1024 = vcvt.s32.f32 %v992
        %v1025 = vcvt.s32.f32 %v993
        %v1026 = vcvt.s32.f32 %v994
        %v1027 = vcvt.s32.f32 %v995
        %v1028 = vpack.c.bf16 %v996, %v996
        %v1029 = vpack.c.bf16 %v997, %v997
        %v1030 = vpack.c.bf16 %v998, %v998
        %v1031 = vpack.c.bf16 %v999, %v999
        %v1032 = vpack.c.bf16 %v1000, %v1000
        %v1033 = vpack.c.bf16 %v1001, %v1001
        %v1034 = vpack.c.bf16 %v1002, %v1002
        %v1035 = vpack.c.bf16 %v1003, %v1003
        %v1036 = vpack.c.bf16 %v1004, %v1004
        %v1037 = vpack.c.bf16 %v1005, %v1005
        %v1038 = vpack.c.bf16 %v1006, %v1006
        %v1039 = vpack.c.bf16 %v1007, %v1007
        %v1040 = vpack.c.bf16 %v1008, %v1008
        %v1041 = vpack.c.bf16 %v1009, %v1009
        %v1042 = vpack.c.bf16 %v1010, %v1010
        %v1043 = vpack.c.bf16 %v1011, %v1011
        %v1044 = vpack.c.bf16 %v1012, %v1012
        %v1045 = vpack.c.bf16 %v1013, %v1013
        %v1046 = vpack.c.bf16 %v1014, %v1014
        %v1047 = vpack.c.bf16 %v1015, %v1015
        %v1048 = vpack.c.bf16 %v1016, %v1016
        %v1049 = vpack.c.bf16 %v1017, %v1017
        %v1050 = vpack.c.bf16 %v1018, %v1018
        %v1051 = vpack.c.bf16 %v1019, %v1019
        %v1052 = vpack.c.bf16 %v1020, %v1020
        %v1053 = vpack.c.bf16 %v1021, %v1021
        %v1054 = vpack.c.bf16 %v1022, %v1022
        %v1055 = vpack.c.bf16 %v1023, %v1023
        %v1056 = vpack.c.bf16 %v1024, %v1024
        %v1057 = vpack.c.bf16 %v1025, %v1025
        %v1058 = vpack.c.bf16 %v1026, %v1026
        %v1059 = vpack.c.bf16 %v1027, %v1027
        %1060 = vst [vmem:[#allocation2 + $0x8] sm:$0xf] %v1028
        %1061 = vst [vmem:[#allocation2 + $0x14] sm:$0xf] %v1029
        %1062 = vst [vmem:[#allocation2 + $0x20] sm:$0xf] %v1030
        %1063 = vst [vmem:[#allocation2 + $0x2c] sm:$0xf] %v1031
        %1064 = vst [vmem:[#allocation2 + $0x38] sm:$0xf] %v1032
        %1065 = vst [vmem:[#allocation2 + $0x44] sm:$0xf] %v1033
        %1066 = vst [vmem:[#allocation2 + $0x50] sm:$0xf] %v1034
        %1067 = vst [vmem:[#allocation2 + $0x5c] sm:$0xf] %v1035
        %1068 = vst [vmem:[#allocation2 + $0x68] sm:$0xf] %v1036
        %1069 = vst [vmem:[#allocation2 + $0x74] sm:$0xf] %v1037
        %1070 = vst [vmem:[#allocation2 + $0x80] sm:$0xf] %v1038
        %1071 = vst [vmem:[#allocation2 + $0x8c] sm:$0xf] %v1039
        %1072 = vst [vmem:[#allocation2 + $0x98] sm:$0xf] %v1040
        %1073 = vst [vmem:[#allocation2 + $0xa4] sm:$0xf] %v1041
        %1074 = vst [vmem:[#allocation2 + $0xb0] sm:$0xf] %v1042
        %1075 = vst [vmem:[#allocation2 + $0xbc] sm:$0xf] %v1043
        %1076 = vst [vmem:[#allocation2 + $0xc8] sm:$0xf] %v1044
        %1077 = vst [vmem:[#allocation2 + $0xd4] sm:$0xf] %v1045
        %1078 = vst [vmem:[#allocation2 + $0xe0] sm:$0xf] %v1046
        %1079 = vst [vmem:[#allocation2 + $0xec] sm:$0xf] %v1047
        %1080 = vst [vmem:[#allocation2 + $0xf8] sm:$0xf] %v1048
        %1081 = vst [vmem:[#allocation2 + $0x104] sm:$0xf] %v1049
        %1082 = vst [vmem:[#allocation2 + $0x110] sm:$0xf] %v1050
        %1083 = vst [vmem:[#allocation2 + $0x11c] sm:$0xf] %v1051
        %1084 = vst [vmem:[#allocation2 + $0x128] sm:$0xf] %v1052
        %1085 = vst [vmem:[#allocation2 + $0x134] sm:$0xf] %v1053
        %1086 = vst [vmem:[#allocation2 + $0x140] sm:$0xf] %v1054
        %1087 = vst [vmem:[#allocation2 + $0x14c] sm:$0xf] %v1055
        %1088 = vst [vmem:[#allocation2 + $0x158] sm:$0xf] %v1056
        %1089 = vst [vmem:[#allocation2 + $0x164] sm:$0xf] %v1057
        %1090 = vst [vmem:[#allocation2 + $0x170] sm:$0xf] %v1058
        %1091 = vst [vmem:[#allocation2 + $0x17c] sm:$0xf] %v1059
        %v1092 = vld [vmem:[#allocation2] sm:$0xff]
        %v1093 = vld [vmem:[#allocation2 + $0x8] sm:$0xf]
        %v1094 = vld [vmem:[#allocation2 + $0xc] sm:$0xff]
        %v1095 = vld [vmem:[#allocation2 + $0x14] sm:$0xf]
        %v1096 = vld [vmem:[#allocation2 + $0x18] sm:$0xff]
        %v1097 = vld [vmem:[#allocation2 + $0x20] sm:$0xf]
        %v1098 = vld [vmem:[#allocation2 + $0x24] sm:$0xff]
        %v1099 = vld [vmem:[#allocation2 + $0x2c] sm:$0xf]
        %v1100 = vld [vmem:[#allocation2 + $0x30] sm:$0xff]
        %v1101 = vld [vmem:[#allocation2 + $0x38] sm:$0xf]
        %v1102 = vld [vmem:[#allocation2 + $0x3c] sm:$0xff]
        %v1103 = vld [vmem:[#allocation2 + $0x44] sm:$0xf]
        %v1104 = vld [vmem:[#allocation2 + $0x48] sm:$0xff]
        %v1105 = vld [vmem:[#allocation2 + $0x50] sm:$0xf]
        %v1106 = vld [vmem:[#allocation2 + $0x54] sm:$0xff]
        %v1107 = vld [vmem:[#allocation2 + $0x5c] sm:$0xf]
        %v1108 = vld [vmem:[#allocation2 + $0x60] sm:$0xff]
        %v1109 = vld [vmem:[#allocation2 + $0x68] sm:$0xf]
        %v1110 = vld [vmem:[#allocation2 + $0x6c] sm:$0xff]
        %v1111 = vld [vmem:[#allocation2 + $0x74] sm:$0xf]
        %v1112 = vld [vmem:[#allocation2 + $0x78] sm:$0xff]
        %v1113 = vld [vmem:[#allocation2 + $0x80] sm:$0xf]
        %v1114 = vld [vmem:[#allocation2 + $0x84] sm:$0xff]
        %v1115 = vld [vmem:[#allocation2 + $0x8c] sm:$0xf]
        %v1116 = vld [vmem:[#allocation2 + $0x90] sm:$0xff]
        %v1117 = vld [vmem:[#allocation2 + $0x98] sm:$0xf]
        %v1118 = vld [vmem:[#allocation2 + $0x9c] sm:$0xff]
        %v1119 = vld [vmem:[#allocation2 + $0xa4] sm:$0xf]
        %v1120 = vld [vmem:[#allocation2 + $0xa8] sm:$0xff]
        %v1121 = vld [vmem:[#allocation2 + $0xb0] sm:$0xf]
        %v1122 = vld [vmem:[#allocation2 + $0xb4] sm:$0xff]
        %v1123 = vld [vmem:[#allocation2 + $0xbc] sm:$0xf]
        %v1124 = vld [vmem:[#allocation2 + $0xc0] sm:$0xff]
        %v1125 = vld [vmem:[#allocation2 + $0xc8] sm:$0xf]
        %v1126 = vld [vmem:[#allocation2 + $0xcc] sm:$0xff]
        %v1127 = vld [vmem:[#allocation2 + $0xd4] sm:$0xf]
        %v1128 = vld [vmem:[#allocation2 + $0xd8] sm:$0xff]
        %v1129 = vld [vmem:[#allocation2 + $0xe0] sm:$0xf]
        %v1130 = vld [vmem:[#allocation2 + $0xe4] sm:$0xff]
        %v1131 = vld [vmem:[#allocation2 + $0xec] sm:$0xf]
        %v1132 = vld [vmem:[#allocation2 + $0xf0] sm:$0xff]
        %v1133 = vld [vmem:[#allocation2 + $0xf8] sm:$0xf]
        %v1134 = vld [vmem:[#allocation2 + $0xfc] sm:$0xff]
        %v1135 = vld [vmem:[#allocation2 + $0x104] sm:$0xf]
        %v1136 = vld [vmem:[#allocation2 + $0x108] sm:$0xff]
        %v1137 = vld [vmem:[#allocation2 + $0x110] sm:$0xf]
        %v1138 = vld [vmem:[#allocation2 + $0x114] sm:$0xff]
        %v1139 = vld [vmem:[#allocation2 + $0x11c] sm:$0xf]
        %v1140 = vld [vmem:[#allocation2 + $0x120] sm:$0xff]
        %v1141 = vld [vmem:[#allocation2 + $0x128] sm:$0xf]
        %v1142 = vld [vmem:[#allocation2 + $0x12c] sm:$0xff]
        %v1143 = vld [vmem:[#allocation2 + $0x134] sm:$0xf]
        %v1144 = vld [vmem:[#allocation2 + $0x138] sm:$0xff]
        %v1145 = vld [vmem:[#allocation2 + $0x140] sm:$0xf]
        %v1146 = vld [vmem:[#allocation2 + $0x144] sm:$0xff]
        %v1147 = vld [vmem:[#allocation2 + $0x14c] sm:$0xf]
        %v1148 = vld [vmem:[#allocation2 + $0x150] sm:$0xff]
        %v1149 = vld [vmem:[#allocation2 + $0x158] sm:$0xf]
        %v1150 = vld [vmem:[#allocation2 + $0x15c] sm:$0xff]
        %v1151 = vld [vmem:[#allocation2 + $0x164] sm:$0xf]
        %v1152 = vld [vmem:[#allocation2 + $0x168] sm:$0xff]
        %v1153 = vld [vmem:[#allocation2 + $0x170] sm:$0xf]
        %v1154 = vld [vmem:[#allocation2 + $0x174] sm:$0xff]
        %v1155 = vld [vmem:[#allocation2 + $0x17c] sm:$0xf]
        %v1156 = vld [vmem:[%s1] sm:$0xf]
        %v1157 = vld [vmem:[%s1 + $0x4] sm:$0xf]
        %v1158 = vld [vmem:[%s1 + $0x8] sm:$0xf]
        %v1159 = vld [vmem:[%s1 + $0xc] sm:$0xf]
        %v1160 = vld [vmem:[%s1 + $0x10] sm:$0xf]
        %v1161 = vld [vmem:[%s1 + $0x14] sm:$0xf]
        %v1162 = vld [vmem:[%s1 + $0x18] sm:$0xf]
        %v1163 = vld [vmem:[%s1 + $0x1c] sm:$0xf]
        %v1164 = vld [vmem:[%s1 + $0x20] sm:$0xf]
        %v1165 = vld [vmem:[%s1 + $0x24] sm:$0xf]
        %v1166 = vld [vmem:[%s1 + $0x28] sm:$0xf]
        %v1167 = vld [vmem:[%s1 + $0x2c] sm:$0xf]
        %v1168 = vld [vmem:[%s1 + $0x30] sm:$0xf]
        %v1169 = vld [vmem:[%s1 + $0x34] sm:$0xf]
        %v1170 = vld [vmem:[%s1 + $0x38] sm:$0xf]
        %v1171 = vld [vmem:[%s1 + $0x3c] sm:$0xf]
        %v1172 = vld [vmem:[%s1 + $0x40] sm:$0xf]
        %v1173 = vld [vmem:[%s1 + $0x44] sm:$0xf]
        %v1174 = vld [vmem:[%s1 + $0x48] sm:$0xf]
        %v1175 = vld [vmem:[%s1 + $0x4c] sm:$0xf]
        %v1176 = vld [vmem:[%s1 + $0x50] sm:$0xf]
        %v1177 = vld [vmem:[%s1 + $0x54] sm:$0xf]
        %v1178 = vld [vmem:[%s1 + $0x58] sm:$0xf]
        %v1179 = vld [vmem:[%s1 + $0x5c] sm:$0xf]
        %v1180 = vld [vmem:[%s1 + $0x60] sm:$0xf]
        %v1181 = vld [vmem:[%s1 + $0x64] sm:$0xf]
        %v1182 = vld [vmem:[%s1 + $0x68] sm:$0xf]
        %v1183 = vld [vmem:[%s1 + $0x6c] sm:$0xf]
        %v1184 = vld [vmem:[%s1 + $0x70] sm:$0xf]
        %v1185 = vld [vmem:[%s1 + $0x74] sm:$0xf]
        %v1186 = vld [vmem:[%s1 + $0x78] sm:$0xf]
        %v1187 = vld [vmem:[%s1 + $0x7c] sm:$0xf]
        %v1188 = vld [vmem:[%s1 + $0x80] sm:$0xf]
        %v1189 = vld [vmem:[%s1 + $0x84] sm:$0xf]
        %v1190 = vld [vmem:[%s1 + $0x88] sm:$0xf]
        %v1191 = vld [vmem:[%s1 + $0x8c] sm:$0xf]
        %v1192 = vld [vmem:[%s1 + $0x90] sm:$0xf]
        %v1193 = vld [vmem:[%s1 + $0x94] sm:$0xf]
        %v1194 = vld [vmem:[%s1 + $0x98] sm:$0xf]
        %v1195 = vld [vmem:[%s1 + $0x9c] sm:$0xf]
        %v1196 = vld [vmem:[%s1 + $0xa0] sm:$0xf]
        %v1197 = vld [vmem:[%s1 + $0xa4] sm:$0xf]
        %v1198 = vld [vmem:[%s1 + $0xa8] sm:$0xf]
        %v1199 = vld [vmem:[%s1 + $0xac] sm:$0xf]
        %v1200 = vld [vmem:[%s1 + $0xb0] sm:$0xf]
        %v1201 = vld [vmem:[%s1 + $0xb4] sm:$0xf]
        %v1202 = vld [vmem:[%s1 + $0xb8] sm:$0xf]
        %v1203 = vld [vmem:[%s1 + $0xbc] sm:$0xf]
        %v1204 = vld [vmem:[%s2] sm:$0x1]
        %v1206 = vperm.slane %v1204, 0
        %v1272 = vunpack.c.l.b16 %v1092
        %v1273 = vunpack.c.h.b16 %v1092
        %v1274 = vunpack.c.l.b16 %v1093
        %v1275 = vunpack.c.l.b16 %v1094
        %v1276 = vunpack.c.h.b16 %v1094
        %v1277 = vunpack.c.l.b16 %v1095
        %v1278 = vunpack.c.l.b16 %v1096
        %v1279 = vunpack.c.h.b16 %v1096
        %v1280 = vunpack.c.l.b16 %v1097
        %v1281 = vunpack.c.l.b16 %v1098
        %v1282 = vunpack.c.h.b16 %v1098
        %v1283 = vunpack.c.l.b16 %v1099
        %v1284 = vunpack.c.l.b16 %v1100
        %v1285 = vunpack.c.h.b16 %v1100
        %v1286 = vunpack.c.l.b16 %v1101
        %v1287 = vunpack.c.l.b16 %v1102
        %v1288 = vunpack.c.h.b16 %v1102
        %v1289 = vunpack.c.l.b16 %v1103
        %v1290 = vunpack.c.l.b16 %v1104
        %v1291 = vunpack.c.h.b16 %v1104
        %v1292 = vunpack.c.l.b16 %v1105
        %v1293 = vunpack.c.l.b16 %v1106
        %v1294 = vunpack.c.h.b16 %v1106
        %v1295 = vunpack.c.l.b16 %v1107
        %v1296 = vunpack.c.l.b16 %v1108
        %v1297 = vunpack.c.h.b16 %v1108
        %v1298 = vunpack.c.l.b16 %v1109
        %v1299 = vunpack.c.l.b16 %v1110
        %v1300 = vunpack.c.h.b16 %v1110
        %v1301 = vunpack.c.l.b16 %v1111
        %v1302 = vunpack.c.l.b16 %v1112
        %v1303 = vunpack.c.h.b16 %v1112
        %v1304 = vunpack.c.l.b16 %v1113
        %v1305 = vunpack.c.l.b16 %v1114
        %v1306 = vunpack.c.h.b16 %v1114
        %v1307 = vunpack.c.l.b16 %v1115
        %v1308 = vunpack.c.l.b16 %v1116
        %v1309 = vunpack.c.h.b16 %v1116
        %v1310 = vunpack.c.l.b16 %v1117
        %v1311 = vunpack.c.l.b16 %v1118
        %v1312 = vunpack.c.h.b16 %v1118
        %v1313 = vunpack.c.l.b16 %v1119
        %v1314 = vunpack.c.l.b16 %v1120
        %v1315 = vunpack.c.h.b16 %v1120
        %v1316 = vunpack.c.l.b16 %v1121
        %v1317 = vunpack.c.l.b16 %v1122
        %v1318 = vunpack.c.h.b16 %v1122
        %v1319 = vunpack.c.l.b16 %v1123
        %v1320 = vunpack.c.l.b16 %v1124
        %v1321 = vunpack.c.h.b16 %v1124
        %v1322 = vunpack.c.l.b16 %v1125
        %v1323 = vunpack.c.l.b16 %v1126
        %v1324 = vunpack.c.h.b16 %v1126
        %v1325 = vunpack.c.l.b16 %v1127
        %v1326 = vunpack.c.l.b16 %v1128
        %v1327 = vunpack.c.h.b16 %v1128
        %v1328 = vunpack.c.l.b16 %v1129
        %v1329 = vunpack.c.l.b16 %v1130
        %v1330 = vunpack.c.h.b16 %v1130
        %v1331 = vunpack.c.l.b16 %v1131
        %v1332 = vunpack.c.l.b16 %v1132
        %v1333 = vunpack.c.h.b16 %v1132
        %v1334 = vunpack.c.l.b16 %v1133
        %v1335 = vunpack.c.l.b16 %v1134
        %v1336 = vunpack.c.h.b16 %v1134
        %v1337 = vunpack.c.l.b16 %v1135
        %v1338 = vunpack.c.l.b16 %v1136
        %v1339 = vunpack.c.h.b16 %v1136
        %v1340 = vunpack.c.l.b16 %v1137
        %v1341 = vunpack.c.l.b16 %v1138
        %v1342 = vunpack.c.h.b16 %v1138
        %v1343 = vunpack.c.l.b16 %v1139
        %v1344 = vunpack.c.l.b16 %v1140
        %v1345 = vunpack.c.h.b16 %v1140
        %v1346 = vunpack.c.l.b16 %v1141
        %v1347 = vunpack.c.l.b16 %v1142
        %v1348 = vunpack.c.h.b16 %v1142
        %v1349 = vunpack.c.l.b16 %v1143
        %v1350 = vunpack.c.l.b16 %v1144
        %v1351 = vunpack.c.h.b16 %v1144
        %v1352 = vunpack.c.l.b16 %v1145
        %v1353 = vunpack.c.l.b16 %v1146
        %v1354 = vunpack.c.h.b16 %v1146
        %v1355 = vunpack.c.l.b16 %v1147
        %v1356 = vunpack.c.l.b16 %v1148
        %v1357 = vunpack.c.h.b16 %v1148
        %v1358 = vunpack.c.l.b16 %v1149
        %v1359 = vunpack.c.l.b16 %v1150
        %v1360 = vunpack.c.h.b16 %v1150
        %v1361 = vunpack.c.l.b16 %v1151
        %v1362 = vunpack.c.l.b16 %v1152
        %v1363 = vunpack.c.h.b16 %v1152
        %v1364 = vunpack.c.l.b16 %v1153
        %v1365 = vunpack.c.l.b16 %v1154
        %v1366 = vunpack.c.h.b16 %v1154
        %v1367 = vunpack.c.l.b16 %v1155
        %v1368 = vpack.c.b16 %v1275, %v1272
        %v1369 = vpack.c.b16 %v1276, %v1273
        %v1370 = vpack.c.b16 %v1277, %v1274
        %v1371 = vpack.c.b16 %v1281, %v1278
        %v1372 = vpack.c.b16 %v1282, %v1279
        %v1373 = vpack.c.b16 %v1283, %v1280
        %v1374 = vpack.c.b16 %v1287, %v1284
        %v1375 = vpack.c.b16 %v1288, %v1285
        %v1376 = vpack.c.b16 %v1289, %v1286
        %v1377 = vpack.c.b16 %v1293, %v1290
        %v1378 = vpack.c.b16 %v1294, %v1291
        %v1379 = vpack.c.b16 %v1295, %v1292
        %v1380 = vpack.c.b16 %v1299, %v1296
        %v1381 = vpack.c.b16 %v1300, %v1297
        %v1382 = vpack.c.b16 %v1301, %v1298
        %v1383 = vpack.c.b16 %v1305, %v1302
        %v1384 = vpack.c.b16 %v1306, %v1303
        %v1385 = vpack.c.b16 %v1307, %v1304
        %v1386 = vpack.c.b16 %v1311, %v1308
        %v1387 = vpack.c.b16 %v1312, %v1309
        %v1388 = vpack.c.b16 %v1313, %v1310
        %v1389 = vpack.c.b16 %v1317, %v1314
        %v1390 = vpack.c.b16 %v1318, %v1315
        %v1391 = vpack.c.b16 %v1319, %v1316
        %v1392 = vpack.c.b16 %v1323, %v1320
        %v1393 = vpack.c.b16 %v1324, %v1321
        %v1394 = vpack.c.b16 %v1325, %v1322
        %v1395 = vpack.c.b16 %v1329, %v1326
        %v1396 = vpack.c.b16 %v1330, %v1327
        %v1397 = vpack.c.b16 %v1331, %v1328
        %v1398 = vpack.c.b16 %v1335, %v1332
        %v1399 = vpack.c.b16 %v1336, %v1333
        %v1400 = vpack.c.b16 %v1337, %v1334
        %v1401 = vpack.c.b16 %v1341, %v1338
        %v1402 = vpack.c.b16 %v1342, %v1339
        %v1403 = vpack.c.b16 %v1343, %v1340
        %v1404 = vpack.c.b16 %v1347, %v1344
        %v1405 = vpack.c.b16 %v1348, %v1345
        %v1406 = vpack.c.b16 %v1349, %v1346
        %v1407 = vpack.c.b16 %v1353, %v1350
        %v1408 = vpack.c.b16 %v1354, %v1351
        %v1409 = vpack.c.b16 %v1355, %v1352
        %v1410 = vpack.c.b16 %v1359, %v1356
        %v1411 = vpack.c.b16 %v1360, %v1357
        %v1412 = vpack.c.b16 %v1361, %v1358
        %v1413 = vpack.c.b16 %v1365, %v1362
        %v1414 = vpack.c.b16 %v1366, %v1363
        %v1415 = vpack.c.b16 %v1367, %v1364
        %v1512 = vunpack.c.l.b16 %v1156
        %v1513 = vunpack.c.l.b16 %v1157
        %v1514 = vunpack.c.l.b16 %v1158
        %v1515 = vunpack.c.l.b16 %v1159
        %v1516 = vunpack.c.l.b16 %v1160
        %v1517 = vunpack.c.l.b16 %v1161
        %v1518 = vunpack.c.l.b16 %v1162
        %v1519 = vunpack.c.l.b16 %v1163
        %v1520 = vunpack.c.l.b16 %v1164
        %v1521 = vunpack.c.l.b16 %v1165
        %v1522 = vunpack.c.l.b16 %v1166
        %v1523 = vunpack.c.l.b16 %v1167
        %v1524 = vunpack.c.l.b16 %v1168
        %v1525 = vunpack.c.l.b16 %v1169
        %v1526 = vunpack.c.l.b16 %v1170
        %v1527 = vunpack.c.l.b16 %v1171
        %v1528 = vunpack.c.l.b16 %v1172
        %v1529 = vunpack.c.l.b16 %v1173
        %v1530 = vunpack.c.l.b16 %v1174
        %v1531 = vunpack.c.l.b16 %v1175
        %v1532 = vunpack.c.l.b16 %v1176
        %v1533 = vunpack.c.l.b16 %v1177
        %v1534 = vunpack.c.l.b16 %v1178
        %v1535 = vunpack.c.l.b16 %v1179
        %v1536 = vunpack.c.l.b16 %v1180
        %v1537 = vunpack.c.l.b16 %v1181
        %v1538 = vunpack.c.l.b16 %v1182
        %v1539 = vunpack.c.l.b16 %v1183
        %v1540 = vunpack.c.l.b16 %v1184
        %v1541 = vunpack.c.l.b16 %v1185
        %v1542 = vunpack.c.l.b16 %v1186
        %v1543 = vunpack.c.l.b16 %v1187
        %v1544 = vunpack.c.l.b16 %v1188
        %v1545 = vunpack.c.l.b16 %v1189
        %v1546 = vunpack.c.l.b16 %v1190
        %v1547 = vunpack.c.l.b16 %v1191
        %v1548 = vunpack.c.l.b16 %v1192
        %v1549 = vunpack.c.l.b16 %v1193
        %v1550 = vunpack.c.l.b16 %v1194
        %v1551 = vunpack.c.l.b16 %v1195
        %v1552 = vunpack.c.l.b16 %v1196
        %v1553 = vunpack.c.l.b16 %v1197
        %v1554 = vunpack.c.l.b16 %v1198
        %v1555 = vunpack.c.l.b16 %v1199
        %v1556 = vunpack.c.l.b16 %v1200
        %v1557 = vunpack.c.l.b16 %v1201
        %v1558 = vunpack.c.l.b16 %v1202
        %v1559 = vunpack.c.l.b16 %v1203
        %v1560 = vpack.c.b16 %v1513, %v1512
        %v1561 = vpack.c.b16 %v1515, %v1514
        %v1562 = vpack.c.b16 %v1517, %v1516
        %v1563 = vpack.c.b16 %v1519, %v1518
        %v1564 = vpack.c.b16 %v1521, %v1520
        %v1565 = vpack.c.b16 %v1523, %v1522
        %v1566 = vpack.c.b16 %v1525, %v1524
        %v1567 = vpack.c.b16 %v1527, %v1526
        %v1568 = vpack.c.b16 %v1529, %v1528
        %v1569 = vpack.c.b16 %v1531, %v1530
        %v1570 = vpack.c.b16 %v1533, %v1532
        %v1571 = vpack.c.b16 %v1535, %v1534
        %v1572 = vpack.c.b16 %v1537, %v1536
        %v1573 = vpack.c.b16 %v1539, %v1538
        %v1574 = vpack.c.b16 %v1541, %v1540
        %v1575 = vpack.c.b16 %v1543, %v1542
        %v1576 = vpack.c.b16 %v1545, %v1544
        %v1577 = vpack.c.b16 %v1547, %v1546
        %v1578 = vpack.c.b16 %v1549, %v1548
        %v1579 = vpack.c.b16 %v1551, %v1550
        %v1580 = vpack.c.b16 %v1553, %v1552
        %v1581 = vpack.c.b16 %v1555, %v1554
        %v1582 = vpack.c.b16 %v1557, %v1556
        %v1583 = vpack.c.b16 %v1559, %v1558
        %1608 = vmatpush.bf16.msra.mxu0 %v1567
        %1609 = vmatpush.bf16.msra.mxu0 %v1566
        %1610 = vmatpush.bf16.msra.mxu0 %v1565
        %1611 = vmatpush.bf16.msra.mxu0 %v1564
        %1612 = vmatpush.bf16.msra.mxu0 %v1563
        %1613 = vmatpush.bf16.msra.mxu0 %v1562
        %1614 = vmatpush.bf16.msra.mxu0 %v1561
        %1615 = vmatpush.bf16.msra.mxu0 %v1560
        %1616 = vmatmul.bf16.gmra.mxu0 %v1368
        %v1617 = vpop.f32.mrf.mxu0
        %v1618 = vadd.f32 %v1206, %v1617
        %v1619 = vpop.f32.mrf.mxu0
        %v1620 = vadd.f32 %v1206, %v1619
        %1621 = vmatmul.bf16.gmra.mxu0 %v1371
        %v1622 = vpop.f32.mrf.mxu0
        %v1623 = vadd.f32 %v1206, %v1622
        %v1624 = vpop.f32.mrf.mxu0
        %v1625 = vadd.f32 %v1206, %v1624
        %1626 = vmatmul.bf16.gmra.mxu0 %v1374
        %v1627 = vpop.f32.mrf.mxu0
        %v1628 = vadd.f32 %v1206, %v1627
        %v1629 = vpop.f32.mrf.mxu0
        %v1630 = vadd.f32 %v1206, %v1629
        %1631 = vmatmul.bf16.gmra.mxu0 %v1377
        %v1632 = vpop.f32.mrf.mxu0
        %v1633 = vadd.f32 %v1206, %v1632
        %v1634 = vpop.f32.mrf.mxu0
        %v1635 = vadd.f32 %v1206, %v1634
        %1636 = vmatmul.bf16.gmra.mxu0 %v1380
        %v1637 = vpop.f32.mrf.mxu0
        %v1638 = vadd.f32 %v1206, %v1637
        %v1639 = vpop.f32.mrf.mxu0
        %v1640 = vadd.f32 %v1206, %v1639
        %1641 = vmatmul.bf16.gmra.mxu0 %v1383
        %v1642 = vpop.f32.mrf.mxu0
        %v1643 = vadd.f32 %v1206, %v1642
        %v1644 = vpop.f32.mrf.mxu0
        %v1645 = vadd.f32 %v1206, %v1644
        %1646 = vmatmul.bf16.gmra.mxu0 %v1386
        %v1647 = vpop.f32.mrf.mxu0
        %v1648 = vadd.f32 %v1206, %v1647
        %v1649 = vpop.f32.mrf.mxu0
        %v1650 = vadd.f32 %v1206, %v1649
        %1651 = vmatmul.bf16.gmra.mxu0 %v1389
        %v1652 = vpop.f32.mrf.mxu0
        %v1653 = vadd.f32 %v1206, %v1652
        %v1654 = vpop.f32.mrf.mxu0
        %v1655 = vadd.f32 %v1206, %v1654
        %1656 = vmatmul.bf16.gmra.mxu0 %v1392
        %v1657 = vpop.f32.mrf.mxu0
        %v1658 = vadd.f32 %v1206, %v1657
        %v1659 = vpop.f32.mrf.mxu0
        %v1660 = vadd.f32 %v1206, %v1659
        %1661 = vmatmul.bf16.gmra.mxu0 %v1395
        %v1662 = vpop.f32.mrf.mxu0
        %v1663 = vadd.f32 %v1206, %v1662
        %v1664 = vpop.f32.mrf.mxu0
        %v1665 = vadd.f32 %v1206, %v1664
        %1666 = vmatmul.bf16.gmra.mxu0 %v1398
        %v1667 = vpop.f32.mrf.mxu0
        %v1668 = vadd.f32 %v1206, %v1667
        %v1669 = vpop.f32.mrf.mxu0
        %v1670 = vadd.f32 %v1206, %v1669
        %1671 = vmatmul.bf16.gmra.mxu0 %v1401
        %v1672 = vpop.f32.mrf.mxu0
        %v1673 = vadd.f32 %v1206, %v1672
        %v1674 = vpop.f32.mrf.mxu0
        %v1675 = vadd.f32 %v1206, %v1674
        %1676 = vmatmul.bf16.gmra.mxu0 %v1404
        %v1677 = vpop.f32.mrf.mxu0
        %v1678 = vadd.f32 %v1206, %v1677
        %v1679 = vpop.f32.mrf.mxu0
        %v1680 = vadd.f32 %v1206, %v1679
        %1681 = vmatmul.bf16.gmra.mxu0 %v1407
        %v1682 = vpop.f32.mrf.mxu0
        %v1683 = vadd.f32 %v1206, %v1682
        %v1684 = vpop.f32.mrf.mxu0
        %v1685 = vadd.f32 %v1206, %v1684
        %1686 = vmatmul.bf16.gmra.mxu0 %v1410
        %v1687 = vpop.f32.mrf.mxu0
        %v1688 = vadd.f32 %v1206, %v1687
        %v1689 = vpop.f32.mrf.mxu0
        %v1690 = vadd.f32 %v1206, %v1689
        %1691 = vmatmul.bf16.gmra.mxu0 %v1413
        %v1692 = vpop.f32.mrf.mxu0
        %v1693 = vadd.f32 %v1206, %v1692
        %v1694 = vpop.f32.mrf.mxu0
        %v1695 = vadd.f32 %v1206, %v1694
        %1696 = vdwg.mxu0
        %1697 = vmatpush.bf16.msra.mxu0 %v1575
        %1698 = vmatpush.bf16.msra.mxu0 %v1574
        %1699 = vmatpush.bf16.msra.mxu0 %v1573
        %1700 = vmatpush.bf16.msra.mxu0 %v1572
        %1701 = vmatpush.bf16.msra.mxu0 %v1571
        %1702 = vmatpush.bf16.msra.mxu0 %v1570
        %1703 = vmatpush.bf16.msra.mxu0 %v1569
        %1704 = vmatpush.bf16.msra.mxu0 %v1568
        %1705 = vmatmul.bf16.gmra.mxu0 %v1369
        %v1706 = vpop.f32.mrf.mxu0
        %v1707 = vadd.f32 %v1618, %v1706
        %v1708 = vpop.f32.mrf.mxu0
        %v1709 = vadd.f32 %v1620, %v1708
        %1710 = vmatmul.bf16.gmra.mxu0 %v1372
        %v1711 = vpop.f32.mrf.mxu0
        %v1712 = vadd.f32 %v1623, %v1711
        %v1713 = vpop.f32.mrf.mxu0
        %v1714 = vadd.f32 %v1625, %v1713
        %1715 = vmatmul.bf16.gmra.mxu0 %v1375
        %v1716 = vpop.f32.mrf.mxu0
        %v1717 = vadd.f32 %v1628, %v1716
        %v1718 = vpop.f32.mrf.mxu0
        %v1719 = vadd.f32 %v1630, %v1718
        %1720 = vmatmul.bf16.gmra.mxu0 %v1378
        %v1721 = vpop.f32.mrf.mxu0
        %v1722 = vadd.f32 %v1633, %v1721
        %v1723 = vpop.f32.mrf.mxu0
        %v1724 = vadd.f32 %v1635, %v1723
        %1725 = vmatmul.bf16.gmra.mxu0 %v1381
        %v1726 = vpop.f32.mrf.mxu0
        %v1727 = vadd.f32 %v1638, %v1726
        %v1728 = vpop.f32.mrf.mxu0
        %v1729 = vadd.f32 %v1640, %v1728
        %1730 = vmatmul.bf16.gmra.mxu0 %v1384
        %v1731 = vpop.f32.mrf.mxu0
        %v1732 = vadd.f32 %v1643, %v1731
        %v1733 = vpop.f32.mrf.mxu0
        %v1734 = vadd.f32 %v1645, %v1733
        %1735 = vmatmul.bf16.gmra.mxu0 %v1387
        %v1736 = vpop.f32.mrf.mxu0
        %v1737 = vadd.f32 %v1648, %v1736
        %v1738 = vpop.f32.mrf.mxu0
        %v1739 = vadd.f32 %v1650, %v1738
        %1740 = vmatmul.bf16.gmra.mxu0 %v1390
        %v1741 = vpop.f32.mrf.mxu0
        %v1742 = vadd.f32 %v1653, %v1741
        %v1743 = vpop.f32.mrf.mxu0
        %v1744 = vadd.f32 %v1655, %v1743
        %1745 = vmatmul.bf16.gmra.mxu0 %v1393
        %v1746 = vpop.f32.mrf.mxu0
        %v1747 = vadd.f32 %v1658, %v1746
        %v1748 = vpop.f32.mrf.mxu0
        %v1749 = vadd.f32 %v1660, %v1748
        %1750 = vmatmul.bf16.gmra.mxu0 %v1396
        %v1751 = vpop.f32.mrf.mxu0
        %v1752 = vadd.f32 %v1663, %v1751
        %v1753 = vpop.f32.mrf.mxu0
        %v1754 = vadd.f32 %v1665, %v1753
        %1755 = vmatmul.bf16.gmra.mxu0 %v1399
        %v1756 = vpop.f32.mrf.mxu0
        %v1757 = vadd.f32 %v1668, %v1756
        %v1758 = vpop.f32.mrf.mxu0
        %v1759 = vadd.f32 %v1670, %v1758
        %1760 = vmatmul.bf16.gmra.mxu0 %v1402
        %v1761 = vpop.f32.mrf.mxu0
        %v1762 = vadd.f32 %v1673, %v1761
        %v1763 = vpop.f32.mrf.mxu0
        %v1764 = vadd.f32 %v1675, %v1763
        %1765 = vmatmul.bf16.gmra.mxu0 %v1405
        %v1766 = vpop.f32.mrf.mxu0
        %v1767 = vadd.f32 %v1678, %v1766
        %v1768 = vpop.f32.mrf.mxu0
        %v1769 = vadd.f32 %v1680, %v1768
        %1770 = vmatmul.bf16.gmra.mxu0 %v1408
        %v1771 = vpop.f32.mrf.mxu0
        %v1772 = vadd.f32 %v1683, %v1771
        %v1773 = vpop.f32.mrf.mxu0
        %v1774 = vadd.f32 %v1685, %v1773
        %1775 = vmatmul.bf16.gmra.mxu0 %v1411
        %v1776 = vpop.f32.mrf.mxu0
        %v1777 = vadd.f32 %v1688, %v1776
        %v1778 = vpop.f32.mrf.mxu0
        %v1779 = vadd.f32 %v1690, %v1778
        %1780 = vmatmul.bf16.gmra.mxu0 %v1414
        %v1781 = vpop.f32.mrf.mxu0
        %v1782 = vadd.f32 %v1693, %v1781
        %v1783 = vpop.f32.mrf.mxu0
        %v1784 = vadd.f32 %v1695, %v1783
        %1785 = vdwg.mxu0
        %1786 = vmatpush.bf16.msra.mxu0 %v1583
        %1787 = vmatpush.bf16.msra.mxu0 %v1582
        %1788 = vmatpush.bf16.msra.mxu0 %v1581
        %1789 = vmatpush.bf16.msra.mxu0 %v1580
        %1790 = vmatpush.bf16.msra.mxu0 %v1579
        %1791 = vmatpush.bf16.msra.mxu0 %v1578
        %1792 = vmatpush.bf16.msra.mxu0 %v1577
        %1793 = vmatpush.bf16.msra.mxu0 %v1576
        %1794 = vmatmul.bf16.gmra.mxu0 %v1370
        %v1795 = vpop.f32.mrf.mxu0
        %v1796 = vadd.f32 %v1707, %v1795
        %v1797 = vpop.f32.mrf.mxu0
        %v1798 = vadd.f32 %v1709, %v1797
        %1799 = vmatmul.bf16.gmra.mxu0 %v1373
        %v1800 = vpop.f32.mrf.mxu0
        %v1801 = vadd.f32 %v1712, %v1800
        %v1802 = vpop.f32.mrf.mxu0
        %v1803 = vadd.f32 %v1714, %v1802
        %1804 = vmatmul.bf16.gmra.mxu0 %v1376
        %v1805 = vpop.f32.mrf.mxu0
        %v1806 = vadd.f32 %v1717, %v1805
        %v1807 = vpop.f32.mrf.mxu0
        %v1808 = vadd.f32 %v1719, %v1807
        %1809 = vmatmul.bf16.gmra.mxu0 %v1379
        %v1810 = vpop.f32.mrf.mxu0
        %v1811 = vadd.f32 %v1722, %v1810
        %v1812 = vpop.f32.mrf.mxu0
        %v1813 = vadd.f32 %v1724, %v1812
        %1814 = vmatmul.bf16.gmra.mxu0 %v1382
        %v1815 = vpop.f32.mrf.mxu0
        %v1816 = vadd.f32 %v1727, %v1815
        %v1817 = vpop.f32.mrf.mxu0
        %v1818 = vadd.f32 %v1729, %v1817
        %1819 = vmatmul.bf16.gmra.mxu0 %v1385
        %v1820 = vpop.f32.mrf.mxu0
        %v1821 = vadd.f32 %v1732, %v1820
        %v1822 = vpop.f32.mrf.mxu0
        %v1823 = vadd.f32 %v1734, %v1822
        %1824 = vmatmul.bf16.gmra.mxu0 %v1388
        %v1825 = vpop.f32.mrf.mxu0
        %v1826 = vadd.f32 %v1737, %v1825
        %v1827 = vpop.f32.mrf.mxu0
        %v1828 = vadd.f32 %v1739, %v1827
        %1829 = vmatmul.bf16.gmra.mxu0 %v1391
        %v1830 = vpop.f32.mrf.mxu0
        %v1831 = vadd.f32 %v1742, %v1830
        %v1832 = vpop.f32.mrf.mxu0
        %v1833 = vadd.f32 %v1744, %v1832
        %1834 = vmatmul.bf16.gmra.mxu0 %v1394
        %v1835 = vpop.f32.mrf.mxu0
        %v1836 = vadd.f32 %v1747, %v1835
        %v1837 = vpop.f32.mrf.mxu0
        %v1838 = vadd.f32 %v1749, %v1837
        %1839 = vmatmul.bf16.gmra.mxu0 %v1397
        %v1840 = vpop.f32.mrf.mxu0
        %v1841 = vadd.f32 %v1752, %v1840
        %v1842 = vpop.f32.mrf.mxu0
        %v1843 = vadd.f32 %v1754, %v1842
        %1844 = vmatmul.bf16.gmra.mxu0 %v1400
        %v1845 = vpop.f32.mrf.mxu0
        %v1846 = vadd.f32 %v1757, %v1845
        %v1847 = vpop.f32.mrf.mxu0
        %v1848 = vadd.f32 %v1759, %v1847
        %1849 = vmatmul.bf16.gmra.mxu0 %v1403
        %v1850 = vpop.f32.mrf.mxu0
        %v1851 = vadd.f32 %v1762, %v1850
        %v1852 = vpop.f32.mrf.mxu0
        %v1853 = vadd.f32 %v1764, %v1852
        %1854 = vmatmul.bf16.gmra.mxu0 %v1406
        %v1855 = vpop.f32.mrf.mxu0
        %v1856 = vadd.f32 %v1767, %v1855
        %v1857 = vpop.f32.mrf.mxu0
        %v1858 = vadd.f32 %v1769, %v1857
        %1859 = vmatmul.bf16.gmra.mxu0 %v1409
        %v1860 = vpop.f32.mrf.mxu0
        %v1861 = vadd.f32 %v1772, %v1860
        %v1862 = vpop.f32.mrf.mxu0
        %v1863 = vadd.f32 %v1774, %v1862
        %1864 = vmatmul.bf16.gmra.mxu0 %v1412
        %v1865 = vpop.f32.mrf.mxu0
        %v1866 = vadd.f32 %v1777, %v1865
        %v1867 = vpop.f32.mrf.mxu0
        %v1868 = vadd.f32 %v1779, %v1867
        %1869 = vmatmul.bf16.gmra.mxu0 %v1415
        %v1870 = vpop.f32.mrf.mxu0
        %v1871 = vadd.f32 %v1782, %v1870
        %v1872 = vpop.f32.mrf.mxu0
        %v1873 = vadd.f32 %v1784, %v1872
        %1874 = vdwg.mxu0
        %v1875 = vxor.u32 %v1796, 2147483648
        %v1876 = vxor.u32 %v1798, 2147483648
        %v1877 = vxor.u32 %v1801, 2147483648
        %v1878 = vxor.u32 %v1803, 2147483648
        %v1879 = vxor.u32 %v1806, 2147483648
        %v1880 = vxor.u32 %v1808, 2147483648
        %v1881 = vxor.u32 %v1811, 2147483648
        %v1882 = vxor.u32 %v1813, 2147483648
        %v1883 = vxor.u32 %v1816, 2147483648
        %v1884 = vxor.u32 %v1818, 2147483648
        %v1885 = vxor.u32 %v1821, 2147483648
        %v1886 = vxor.u32 %v1823, 2147483648
        %v1887 = vxor.u32 %v1826, 2147483648
        %v1888 = vxor.u32 %v1828, 2147483648
        %v1889 = vxor.u32 %v1831, 2147483648
        %v1890 = vxor.u32 %v1833, 2147483648
        %v1891 = vxor.u32 %v1836, 2147483648
        %v1892 = vxor.u32 %v1838, 2147483648
        %v1893 = vxor.u32 %v1841, 2147483648
        %v1894 = vxor.u32 %v1843, 2147483648
        %v1895 = vxor.u32 %v1846, 2147483648
        %v1896 = vxor.u32 %v1848, 2147483648
        %v1897 = vxor.u32 %v1851, 2147483648
        %v1898 = vxor.u32 %v1853, 2147483648
        %v1899 = vxor.u32 %v1856, 2147483648
        %v1900 = vxor.u32 %v1858, 2147483648
        %v1901 = vxor.u32 %v1861, 2147483648
        %v1902 = vxor.u32 %v1863, 2147483648
        %v1903 = vxor.u32 %v1866, 2147483648
        %v1904 = vxor.u32 %v1868, 2147483648
        %v1905 = vxor.u32 %v1871, 2147483648
        %v1906 = vxor.u32 %v1873, 2147483648
        %v1907 = vmul.f32 %v1875, 1.442695
        %v1908 = vpow.pop %v1907
        %v1909 = vmul.f32 %v1876, 1.442695
        %v1910 = vpow.pop %v1909
        %v1911 = vmul.f32 %v1877, 1.442695
        %v1912 = vpow.pop %v1911
        %v1913 = vmul.f32 %v1878, 1.442695
        %v1914 = vpow.pop %v1913
        %v1915 = vmul.f32 %v1879, 1.442695
        %v1916 = vpow.pop %v1915
        %v1917 = vmul.f32 %v1880, 1.442695
        %v1918 = vpow.pop %v1917
        %v1919 = vmul.f32 %v1881, 1.442695
        %v1920 = vpow.pop %v1919
        %v1921 = vmul.f32 %v1882, 1.442695
        %v1922 = vpow.pop %v1921
        %v1923 = vmul.f32 %v1883, 1.442695
        %v1924 = vpow.pop %v1923
        %v1925 = vmul.f32 %v1884, 1.442695
        %v1926 = vpow.pop %v1925
        %v1927 = vmul.f32 %v1885, 1.442695
        %v1928 = vpow.pop %v1927
        %v1929 = vmul.f32 %v1886, 1.442695
        %v1930 = vpow.pop %v1929
        %v1931 = vmul.f32 %v1887, 1.442695
        %v1932 = vpow.pop %v1931
        %v1933 = vmul.f32 %v1888, 1.442695
        %v1934 = vpow.pop %v1933
        %v1935 = vmul.f32 %v1889, 1.442695
        %v1936 = vpow.pop %v1935
        %v1937 = vmul.f32 %v1890, 1.442695
        %v1938 = vpow.pop %v1937
        %v1939 = vmul.f32 %v1891, 1.442695
        %v1940 = vpow.pop %v1939
        %v1941 = vmul.f32 %v1892, 1.442695
        %v1942 = vpow.pop %v1941
        %v1943 = vmul.f32 %v1893, 1.442695
        %v1944 = vpow.pop %v1943
        %v1945 = vmul.f32 %v1894, 1.442695
        %v1946 = vpow.pop %v1945
        %v1947 = vmul.f32 %v1895, 1.442695
        %v1948 = vpow.pop %v1947
        %v1949 = vmul.f32 %v1896, 1.442695
        %v1950 = vpow.pop %v1949
        %v1951 = vmul.f32 %v1897, 1.442695
        %v1952 = vpow.pop %v1951
        %v1953 = vmul.f32 %v1898, 1.442695
        %v1954 = vpow.pop %v1953
        %v1955 = vmul.f32 %v1899, 1.442695
        %v1956 = vpow.pop %v1955
        %v1957 = vmul.f32 %v1900, 1.442695
        %v1958 = vpow.pop %v1957
        %v1959 = vmul.f32 %v1901, 1.442695
        %v1960 = vpow.pop %v1959
        %v1961 = vmul.f32 %v1902, 1.442695
        %v1962 = vpow.pop %v1961
        %v1963 = vmul.f32 %v1903, 1.442695
        %v1964 = vpow.pop %v1963
        %v1965 = vmul.f32 %v1904, 1.442695
        %v1966 = vpow.pop %v1965
        %v1967 = vmul.f32 %v1905, 1.442695
        %v1968 = vpow.pop %v1967
        %v1969 = vmul.f32 %v1906, 1.442695
        %v1970 = vpow.pop %v1969
        %v1971 = vadd.f32 %v1908, 1.0
        %v1972 = vadd.f32 %v1910, 1.0
        %v1973 = vadd.f32 %v1912, 1.0
        %v1974 = vadd.f32 %v1914, 1.0
        %v1975 = vadd.f32 %v1916, 1.0
        %v1976 = vadd.f32 %v1918, 1.0
        %v1977 = vadd.f32 %v1920, 1.0
        %v1978 = vadd.f32 %v1922, 1.0
        %v1979 = vadd.f32 %v1924, 1.0
        %v1980 = vadd.f32 %v1926, 1.0
        %v1981 = vadd.f32 %v1928, 1.0
        %v1982 = vadd.f32 %v1930, 1.0
        %v1983 = vadd.f32 %v1932, 1.0
        %v1984 = vadd.f32 %v1934, 1.0
        %v1985 = vadd.f32 %v1936, 1.0
        %v1986 = vadd.f32 %v1938, 1.0
        %v1987 = vadd.f32 %v1940, 1.0
        %v1988 = vadd.f32 %v1942, 1.0
        %v1989 = vadd.f32 %v1944, 1.0
        %v1990 = vadd.f32 %v1946, 1.0
        %v1991 = vadd.f32 %v1948, 1.0
        %v1992 = vadd.f32 %v1950, 1.0
        %v1993 = vadd.f32 %v1952, 1.0
        %v1994 = vadd.f32 %v1954, 1.0
        %v1995 = vadd.f32 %v1956, 1.0
        %v1996 = vadd.f32 %v1958, 1.0
        %v1997 = vadd.f32 %v1960, 1.0
        %v1998 = vadd.f32 %v1962, 1.0
        %v1999 = vadd.f32 %v1964, 1.0
        %v2000 = vadd.f32 %v1966, 1.0
        %v2001 = vadd.f32 %v1968, 1.0
        %v2002 = vadd.f32 %v1970, 1.0
        %v2003 = vrcp.pop %v1971
        %v2004 = vmul.f32 %v1971, %v2003
        %v2005 = vsub.f32 1.0, %v2004
        %v2006 = vmul.f32 %v2003, %v2005
        %v2007 = vadd.f32 %v2003, %v2006
        %vm2008 = vweird.f32 %v1971
        %vm2009 = vweird.f32 %v2003
        %vm2010 = vmor %vm2008, %vm2009
        %v2011 = vsel %vm2010, %v2003, %v2007
        %v2012 = vand.u32 2147483647, %v1971
        %vm2013 = vcmp.eq.f32.partialorder %v2012, 8.507059e+37
        %v2014 = vand.u32 %v1971, 2147483648
        %v2015 = vor.u32 1.1754944e-38, %v2014
        %v2016 = vsel %vm2013, %v2015, %v2011
        %v2017 = vmul.f32 1.0, %v2016
        %v2018 = vrcp.pop %v1972
        %v2019 = vmul.f32 %v1972, %v2018
        %v2020 = vsub.f32 1.0, %v2019
        %v2021 = vmul.f32 %v2018, %v2020
        %v2022 = vadd.f32 %v2018, %v2021
        %vm2023 = vweird.f32 %v1972
        %vm2024 = vweird.f32 %v2018
        %vm2025 = vmor %vm2023, %vm2024
        %v2026 = vsel %vm2025, %v2018, %v2022
        %v2027 = vand.u32 2147483647, %v1972
        %vm2028 = vcmp.eq.f32.partialorder %v2027, 8.507059e+37
        %v2029 = vand.u32 %v1972, 2147483648
        %v2030 = vor.u32 1.1754944e-38, %v2029
        %v2031 = vsel %vm2028, %v2030, %v2026
        %v2032 = vmul.f32 1.0, %v2031
        %v2033 = vrcp.pop %v1973
        %v2034 = vmul.f32 %v1973, %v2033
        %v2035 = vsub.f32 1.0, %v2034
        %v2036 = vmul.f32 %v2033, %v2035
        %v2037 = vadd.f32 %v2033, %v2036
        %vm2038 = vweird.f32 %v1973
        %vm2039 = vweird.f32 %v2033
        %vm2040 = vmor %vm2038, %vm2039
        %v2041 = vsel %vm2040, %v2033, %v2037
        %v2042 = vand.u32 2147483647, %v1973
        %vm2043 = vcmp.eq.f32.partialorder %v2042, 8.507059e+37
        %v2044 = vand.u32 %v1973, 2147483648
        %v2045 = vor.u32 1.1754944e-38, %v2044
        %v2046 = vsel %vm2043, %v2045, %v2041
        %v2047 = vmul.f32 1.0, %v2046
        %v2048 = vrcp.pop %v1974
        %v2049 = vmul.f32 %v1974, %v2048
        %v2050 = vsub.f32 1.0, %v2049
        %v2051 = vmul.f32 %v2048, %v2050
        %v2052 = vadd.f32 %v2048, %v2051
        %vm2053 = vweird.f32 %v1974
        %vm2054 = vweird.f32 %v2048
        %vm2055 = vmor %vm2053, %vm2054
        %v2056 = vsel %vm2055, %v2048, %v2052
        %v2057 = vand.u32 2147483647, %v1974
        %vm2058 = vcmp.eq.f32.partialorder %v2057, 8.507059e+37
        %v2059 = vand.u32 %v1974, 2147483648
        %v2060 = vor.u32 1.1754944e-38, %v2059
        %v2061 = vsel %vm2058, %v2060, %v2056
        %v2062 = vmul.f32 1.0, %v2061
        %v2063 = vrcp.pop %v1975
        %v2064 = vmul.f32 %v1975, %v2063
        %v2065 = vsub.f32 1.0, %v2064
        %v2066 = vmul.f32 %v2063, %v2065
        %v2067 = vadd.f32 %v2063, %v2066
        %vm2068 = vweird.f32 %v1975
        %vm2069 = vweird.f32 %v2063
        %vm2070 = vmor %vm2068, %vm2069
        %v2071 = vsel %vm2070, %v2063, %v2067
        %v2072 = vand.u32 2147483647, %v1975
        %vm2073 = vcmp.eq.f32.partialorder %v2072, 8.507059e+37
        %v2074 = vand.u32 %v1975, 2147483648
        %v2075 = vor.u32 1.1754944e-38, %v2074
        %v2076 = vsel %vm2073, %v2075, %v2071
        %v2077 = vmul.f32 1.0, %v2076
        %v2078 = vrcp.pop %v1976
        %v2079 = vmul.f32 %v1976, %v2078
        %v2080 = vsub.f32 1.0, %v2079
        %v2081 = vmul.f32 %v2078, %v2080
        %v2082 = vadd.f32 %v2078, %v2081
        %vm2083 = vweird.f32 %v1976
        %vm2084 = vweird.f32 %v2078
        %vm2085 = vmor %vm2083, %vm2084
        %v2086 = vsel %vm2085, %v2078, %v2082
        %v2087 = vand.u32 2147483647, %v1976
        %vm2088 = vcmp.eq.f32.partialorder %v2087, 8.507059e+37
        %v2089 = vand.u32 %v1976, 2147483648
        %v2090 = vor.u32 1.1754944e-38, %v2089
        %v2091 = vsel %vm2088, %v2090, %v2086
        %v2092 = vmul.f32 1.0, %v2091
        %v2093 = vrcp.pop %v1977
        %v2094 = vmul.f32 %v1977, %v2093
        %v2095 = vsub.f32 1.0, %v2094
        %v2096 = vmul.f32 %v2093, %v2095
        %v2097 = vadd.f32 %v2093, %v2096
        %vm2098 = vweird.f32 %v1977
        %vm2099 = vweird.f32 %v2093
        %vm2100 = vmor %vm2098, %vm2099
        %v2101 = vsel %vm2100, %v2093, %v2097
        %v2102 = vand.u32 2147483647, %v1977
        %vm2103 = vcmp.eq.f32.partialorder %v2102, 8.507059e+37
        %v2104 = vand.u32 %v1977, 2147483648
        %v2105 = vor.u32 1.1754944e-38, %v2104
        %v2106 = vsel %vm2103, %v2105, %v2101
        %v2107 = vmul.f32 1.0, %v2106
        %v2108 = vrcp.pop %v1978
        %v2109 = vmul.f32 %v1978, %v2108
        %v2110 = vsub.f32 1.0, %v2109
        %v2111 = vmul.f32 %v2108, %v2110
        %v2112 = vadd.f32 %v2108, %v2111
        %vm2113 = vweird.f32 %v1978
        %vm2114 = vweird.f32 %v2108
        %vm2115 = vmor %vm2113, %vm2114
        %v2116 = vsel %vm2115, %v2108, %v2112
        %v2117 = vand.u32 2147483647, %v1978
        %vm2118 = vcmp.eq.f32.partialorder %v2117, 8.507059e+37
        %v2119 = vand.u32 %v1978, 2147483648
        %v2120 = vor.u32 1.1754944e-38, %v2119
        %v2121 = vsel %vm2118, %v2120, %v2116
        %v2122 = vmul.f32 1.0, %v2121
        %v2123 = vrcp.pop %v1979
        %v2124 = vmul.f32 %v1979, %v2123
        %v2125 = vsub.f32 1.0, %v2124
        %v2126 = vmul.f32 %v2123, %v2125
        %v2127 = vadd.f32 %v2123, %v2126
        %vm2128 = vweird.f32 %v1979
        %vm2129 = vweird.f32 %v2123
        %vm2130 = vmor %vm2128, %vm2129
        %v2131 = vsel %vm2130, %v2123, %v2127
        %v2132 = vand.u32 2147483647, %v1979
        %vm2133 = vcmp.eq.f32.partialorder %v2132, 8.507059e+37
        %v2134 = vand.u32 %v1979, 2147483648
        %v2135 = vor.u32 1.1754944e-38, %v2134
        %v2136 = vsel %vm2133, %v2135, %v2131
        %v2137 = vmul.f32 1.0, %v2136
        %v2138 = vrcp.pop %v1980
        %v2139 = vmul.f32 %v1980, %v2138
        %v2140 = vsub.f32 1.0, %v2139
        %v2141 = vmul.f32 %v2138, %v2140
        %v2142 = vadd.f32 %v2138, %v2141
        %vm2143 = vweird.f32 %v1980
        %vm2144 = vweird.f32 %v2138
        %vm2145 = vmor %vm2143, %vm2144
        %v2146 = vsel %vm2145, %v2138, %v2142
        %v2147 = vand.u32 2147483647, %v1980
        %vm2148 = vcmp.eq.f32.partialorder %v2147, 8.507059e+37
        %v2149 = vand.u32 %v1980, 2147483648
        %v2150 = vor.u32 1.1754944e-38, %v2149
        %v2151 = vsel %vm2148, %v2150, %v2146
        %v2152 = vmul.f32 1.0, %v2151
        %v2153 = vrcp.pop %v1981
        %v2154 = vmul.f32 %v1981, %v2153
        %v2155 = vsub.f32 1.0, %v2154
        %v2156 = vmul.f32 %v2153, %v2155
        %v2157 = vadd.f32 %v2153, %v2156
        %vm2158 = vweird.f32 %v1981
        %vm2159 = vweird.f32 %v2153
        %vm2160 = vmor %vm2158, %vm2159
        %v2161 = vsel %vm2160, %v2153, %v2157
        %v2162 = vand.u32 2147483647, %v1981
        %vm2163 = vcmp.eq.f32.partialorder %v2162, 8.507059e+37
        %v2164 = vand.u32 %v1981, 2147483648
        %v2165 = vor.u32 1.1754944e-38, %v2164
        %v2166 = vsel %vm2163, %v2165, %v2161
        %v2167 = vmul.f32 1.0, %v2166
        %v2168 = vrcp.pop %v1982
        %v2169 = vmul.f32 %v1982, %v2168
        %v2170 = vsub.f32 1.0, %v2169
        %v2171 = vmul.f32 %v2168, %v2170
        %v2172 = vadd.f32 %v2168, %v2171
        %vm2173 = vweird.f32 %v1982
        %vm2174 = vweird.f32 %v2168
        %vm2175 = vmor %vm2173, %vm2174
        %v2176 = vsel %vm2175, %v2168, %v2172
        %v2177 = vand.u32 2147483647, %v1982
        %vm2178 = vcmp.eq.f32.partialorder %v2177, 8.507059e+37
        %v2179 = vand.u32 %v1982, 2147483648
        %v2180 = vor.u32 1.1754944e-38, %v2179
        %v2181 = vsel %vm2178, %v2180, %v2176
        %v2182 = vmul.f32 1.0, %v2181
        %v2183 = vrcp.pop %v1983
        %v2184 = vmul.f32 %v1983, %v2183
        %v2185 = vsub.f32 1.0, %v2184
        %v2186 = vmul.f32 %v2183, %v2185
        %v2187 = vadd.f32 %v2183, %v2186
        %vm2188 = vweird.f32 %v1983
        %vm2189 = vweird.f32 %v2183
        %vm2190 = vmor %vm2188, %vm2189
        %v2191 = vsel %vm2190, %v2183, %v2187
        %v2192 = vand.u32 2147483647, %v1983
        %vm2193 = vcmp.eq.f32.partialorder %v2192, 8.507059e+37
        %v2194 = vand.u32 %v1983, 2147483648
        %v2195 = vor.u32 1.1754944e-38, %v2194
        %v2196 = vsel %vm2193, %v2195, %v2191
        %v2197 = vmul.f32 1.0, %v2196
        %v2198 = vrcp.pop %v1984
        %v2199 = vmul.f32 %v1984, %v2198
        %v2200 = vsub.f32 1.0, %v2199
        %v2201 = vmul.f32 %v2198, %v2200
        %v2202 = vadd.f32 %v2198, %v2201
        %vm2203 = vweird.f32 %v1984
        %vm2204 = vweird.f32 %v2198
        %vm2205 = vmor %vm2203, %vm2204
        %v2206 = vsel %vm2205, %v2198, %v2202
        %v2207 = vand.u32 2147483647, %v1984
        %vm2208 = vcmp.eq.f32.partialorder %v2207, 8.507059e+37
        %v2209 = vand.u32 %v1984, 2147483648
        %v2210 = vor.u32 1.1754944e-38, %v2209
        %v2211 = vsel %vm2208, %v2210, %v2206
        %v2212 = vmul.f32 1.0, %v2211
        %v2213 = vrcp.pop %v1985
        %v2214 = vmul.f32 %v1985, %v2213
        %v2215 = vsub.f32 1.0, %v2214
        %v2216 = vmul.f32 %v2213, %v2215
        %v2217 = vadd.f32 %v2213, %v2216
        %vm2218 = vweird.f32 %v1985
        %vm2219 = vweird.f32 %v2213
        %vm2220 = vmor %vm2218, %vm2219
        %v2221 = vsel %vm2220, %v2213, %v2217
        %v2222 = vand.u32 2147483647, %v1985
        %vm2223 = vcmp.eq.f32.partialorder %v2222, 8.507059e+37
        %v2224 = vand.u32 %v1985, 2147483648
        %v2225 = vor.u32 1.1754944e-38, %v2224
        %v2226 = vsel %vm2223, %v2225, %v2221
        %v2227 = vmul.f32 1.0, %v2226
        %v2228 = vrcp.pop %v1986
        %v2229 = vmul.f32 %v1986, %v2228
        %v2230 = vsub.f32 1.0, %v2229
        %v2231 = vmul.f32 %v2228, %v2230
        %v2232 = vadd.f32 %v2228, %v2231
        %vm2233 = vweird.f32 %v1986
        %vm2234 = vweird.f32 %v2228
        %vm2235 = vmor %vm2233, %vm2234
        %v2236 = vsel %vm2235, %v2228, %v2232
        %v2237 = vand.u32 2147483647, %v1986
        %vm2238 = vcmp.eq.f32.partialorder %v2237, 8.507059e+37
        %v2239 = vand.u32 %v1986, 2147483648
        %v2240 = vor.u32 1.1754944e-38, %v2239
        %v2241 = vsel %vm2238, %v2240, %v2236
        %v2242 = vmul.f32 1.0, %v2241
        %v2243 = vrcp.pop %v1987
        %v2244 = vmul.f32 %v1987, %v2243
        %v2245 = vsub.f32 1.0, %v2244
        %v2246 = vmul.f32 %v2243, %v2245
        %v2247 = vadd.f32 %v2243, %v2246
        %vm2248 = vweird.f32 %v1987
        %vm2249 = vweird.f32 %v2243
        %vm2250 = vmor %vm2248, %vm2249
        %v2251 = vsel %vm2250, %v2243, %v2247
        %v2252 = vand.u32 2147483647, %v1987
        %vm2253 = vcmp.eq.f32.partialorder %v2252, 8.507059e+37
        %v2254 = vand.u32 %v1987, 2147483648
        %v2255 = vor.u32 1.1754944e-38, %v2254
        %v2256 = vsel %vm2253, %v2255, %v2251
        %v2257 = vmul.f32 1.0, %v2256
        %v2258 = vrcp.pop %v1988
        %v2259 = vmul.f32 %v1988, %v2258
        %v2260 = vsub.f32 1.0, %v2259
        %v2261 = vmul.f32 %v2258, %v2260
        %v2262 = vadd.f32 %v2258, %v2261
        %vm2263 = vweird.f32 %v1988
        %vm2264 = vweird.f32 %v2258
        %vm2265 = vmor %vm2263, %vm2264
        %v2266 = vsel %vm2265, %v2258, %v2262
        %v2267 = vand.u32 2147483647, %v1988
        %vm2268 = vcmp.eq.f32.partialorder %v2267, 8.507059e+37
        %v2269 = vand.u32 %v1988, 2147483648
        %v2270 = vor.u32 1.1754944e-38, %v2269
        %v2271 = vsel %vm2268, %v2270, %v2266
        %v2272 = vmul.f32 1.0, %v2271
        %v2273 = vrcp.pop %v1989
        %v2274 = vmul.f32 %v1989, %v2273
        %v2275 = vsub.f32 1.0, %v2274
        %v2276 = vmul.f32 %v2273, %v2275
        %v2277 = vadd.f32 %v2273, %v2276
        %vm2278 = vweird.f32 %v1989
        %vm2279 = vweird.f32 %v2273
        %vm2280 = vmor %vm2278, %vm2279
        %v2281 = vsel %vm2280, %v2273, %v2277
        %v2282 = vand.u32 2147483647, %v1989
        %vm2283 = vcmp.eq.f32.partialorder %v2282, 8.507059e+37
        %v2284 = vand.u32 %v1989, 2147483648
        %v2285 = vor.u32 1.1754944e-38, %v2284
        %v2286 = vsel %vm2283, %v2285, %v2281
        %v2287 = vmul.f32 1.0, %v2286
        %v2288 = vrcp.pop %v1990
        %v2289 = vmul.f32 %v1990, %v2288
        %v2290 = vsub.f32 1.0, %v2289
        %v2291 = vmul.f32 %v2288, %v2290
        %v2292 = vadd.f32 %v2288, %v2291
        %vm2293 = vweird.f32 %v1990
        %vm2294 = vweird.f32 %v2288
        %vm2295 = vmor %vm2293, %vm2294
        %v2296 = vsel %vm2295, %v2288, %v2292
        %v2297 = vand.u32 2147483647, %v1990
        %vm2298 = vcmp.eq.f32.partialorder %v2297, 8.507059e+37
        %v2299 = vand.u32 %v1990, 2147483648
        %v2300 = vor.u32 1.1754944e-38, %v2299
        %v2301 = vsel %vm2298, %v2300, %v2296
        %v2302 = vmul.f32 1.0, %v2301
        %v2303 = vrcp.pop %v1991
        %v2304 = vmul.f32 %v1991, %v2303
        %v2305 = vsub.f32 1.0, %v2304
        %v2306 = vmul.f32 %v2303, %v2305
        %v2307 = vadd.f32 %v2303, %v2306
        %vm2308 = vweird.f32 %v1991
        %vm2309 = vweird.f32 %v2303
        %vm2310 = vmor %vm2308, %vm2309
        %v2311 = vsel %vm2310, %v2303, %v2307
        %v2312 = vand.u32 2147483647, %v1991
        %vm2313 = vcmp.eq.f32.partialorder %v2312, 8.507059e+37
        %v2314 = vand.u32 %v1991, 2147483648
        %v2315 = vor.u32 1.1754944e-38, %v2314
        %v2316 = vsel %vm2313, %v2315, %v2311
        %v2317 = vmul.f32 1.0, %v2316
        %v2318 = vrcp.pop %v1992
        %v2319 = vmul.f32 %v1992, %v2318
        %v2320 = vsub.f32 1.0, %v2319
        %v2321 = vmul.f32 %v2318, %v2320
        %v2322 = vadd.f32 %v2318, %v2321
        %vm2323 = vweird.f32 %v1992
        %vm2324 = vweird.f32 %v2318
        %vm2325 = vmor %vm2323, %vm2324
        %v2326 = vsel %vm2325, %v2318, %v2322
        %v2327 = vand.u32 2147483647, %v1992
        %vm2328 = vcmp.eq.f32.partialorder %v2327, 8.507059e+37
        %v2329 = vand.u32 %v1992, 2147483648
        %v2330 = vor.u32 1.1754944e-38, %v2329
        %v2331 = vsel %vm2328, %v2330, %v2326
        %v2332 = vmul.f32 1.0, %v2331
        %v2333 = vrcp.pop %v1993
        %v2334 = vmul.f32 %v1993, %v2333
        %v2335 = vsub.f32 1.0, %v2334
        %v2336 = vmul.f32 %v2333, %v2335
        %v2337 = vadd.f32 %v2333, %v2336
        %vm2338 = vweird.f32 %v1993
        %vm2339 = vweird.f32 %v2333
        %vm2340 = vmor %vm2338, %vm2339
        %v2341 = vsel %vm2340, %v2333, %v2337
        %v2342 = vand.u32 2147483647, %v1993
        %vm2343 = vcmp.eq.f32.partialorder %v2342, 8.507059e+37
        %v2344 = vand.u32 %v1993, 2147483648
        %v2345 = vor.u32 1.1754944e-38, %v2344
        %v2346 = vsel %vm2343, %v2345, %v2341
        %v2347 = vmul.f32 1.0, %v2346
        %v2348 = vrcp.pop %v1994
        %v2349 = vmul.f32 %v1994, %v2348
        %v2350 = vsub.f32 1.0, %v2349
        %v2351 = vmul.f32 %v2348, %v2350
        %v2352 = vadd.f32 %v2348, %v2351
        %vm2353 = vweird.f32 %v1994
        %vm2354 = vweird.f32 %v2348
        %vm2355 = vmor %vm2353, %vm2354
        %v2356 = vsel %vm2355, %v2348, %v2352
        %v2357 = vand.u32 2147483647, %v1994
        %vm2358 = vcmp.eq.f32.partialorder %v2357, 8.507059e+37
        %v2359 = vand.u32 %v1994, 2147483648
        %v2360 = vor.u32 1.1754944e-38, %v2359
        %v2361 = vsel %vm2358, %v2360, %v2356
        %v2362 = vmul.f32 1.0, %v2361
        %v2363 = vrcp.pop %v1995
        %v2364 = vmul.f32 %v1995, %v2363
        %v2365 = vsub.f32 1.0, %v2364
        %v2366 = vmul.f32 %v2363, %v2365
        %v2367 = vadd.f32 %v2363, %v2366
        %vm2368 = vweird.f32 %v1995
        %vm2369 = vweird.f32 %v2363
        %vm2370 = vmor %vm2368, %vm2369
        %v2371 = vsel %vm2370, %v2363, %v2367
        %v2372 = vand.u32 2147483647, %v1995
        %vm2373 = vcmp.eq.f32.partialorder %v2372, 8.507059e+37
        %v2374 = vand.u32 %v1995, 2147483648
        %v2375 = vor.u32 1.1754944e-38, %v2374
        %v2376 = vsel %vm2373, %v2375, %v2371
        %v2377 = vmul.f32 1.0, %v2376
        %v2378 = vrcp.pop %v1996
        %v2379 = vmul.f32 %v1996, %v2378
        %v2380 = vsub.f32 1.0, %v2379
        %v2381 = vmul.f32 %v2378, %v2380
        %v2382 = vadd.f32 %v2378, %v2381
        %vm2383 = vweird.f32 %v1996
        %vm2384 = vweird.f32 %v2378
        %vm2385 = vmor %vm2383, %vm2384
        %v2386 = vsel %vm2385, %v2378, %v2382
        %v2387 = vand.u32 2147483647, %v1996
        %vm2388 = vcmp.eq.f32.partialorder %v2387, 8.507059e+37
        %v2389 = vand.u32 %v1996, 2147483648
        %v2390 = vor.u32 1.1754944e-38, %v2389
        %v2391 = vsel %vm2388, %v2390, %v2386
        %v2392 = vmul.f32 1.0, %v2391
        %v2393 = vrcp.pop %v1997
        %v2394 = vmul.f32 %v1997, %v2393
        %v2395 = vsub.f32 1.0, %v2394
        %v2396 = vmul.f32 %v2393, %v2395
        %v2397 = vadd.f32 %v2393, %v2396
        %vm2398 = vweird.f32 %v1997
        %vm2399 = vweird.f32 %v2393
        %vm2400 = vmor %vm2398, %vm2399
        %v2401 = vsel %vm2400, %v2393, %v2397
        %v2402 = vand.u32 2147483647, %v1997
        %vm2403 = vcmp.eq.f32.partialorder %v2402, 8.507059e+37
        %v2404 = vand.u32 %v1997, 2147483648
        %v2405 = vor.u32 1.1754944e-38, %v2404
        %v2406 = vsel %vm2403, %v2405, %v2401
        %v2407 = vmul.f32 1.0, %v2406
        %v2408 = vrcp.pop %v1998
        %v2409 = vmul.f32 %v1998, %v2408
        %v2410 = vsub.f32 1.0, %v2409
        %v2411 = vmul.f32 %v2408, %v2410
        %v2412 = vadd.f32 %v2408, %v2411
        %vm2413 = vweird.f32 %v1998
        %vm2414 = vweird.f32 %v2408
        %vm2415 = vmor %vm2413, %vm2414
        %v2416 = vsel %vm2415, %v2408, %v2412
        %v2417 = vand.u32 2147483647, %v1998
        %vm2418 = vcmp.eq.f32.partialorder %v2417, 8.507059e+37
        %v2419 = vand.u32 %v1998, 2147483648
        %v2420 = vor.u32 1.1754944e-38, %v2419
        %v2421 = vsel %vm2418, %v2420, %v2416
        %v2422 = vmul.f32 1.0, %v2421
        %v2423 = vrcp.pop %v1999
        %v2424 = vmul.f32 %v1999, %v2423
        %v2425 = vsub.f32 1.0, %v2424
        %v2426 = vmul.f32 %v2423, %v2425
        %v2427 = vadd.f32 %v2423, %v2426
        %vm2428 = vweird.f32 %v1999
        %vm2429 = vweird.f32 %v2423
        %vm2430 = vmor %vm2428, %vm2429
        %v2431 = vsel %vm2430, %v2423, %v2427
        %v2432 = vand.u32 2147483647, %v1999
        %vm2433 = vcmp.eq.f32.partialorder %v2432, 8.507059e+37
        %v2434 = vand.u32 %v1999, 2147483648
        %v2435 = vor.u32 1.1754944e-38, %v2434
        %v2436 = vsel %vm2433, %v2435, %v2431
        %v2437 = vmul.f32 1.0, %v2436
        %v2438 = vrcp.pop %v2000
        %v2439 = vmul.f32 %v2000, %v2438
        %v2440 = vsub.f32 1.0, %v2439
        %v2441 = vmul.f32 %v2438, %v2440
        %v2442 = vadd.f32 %v2438, %v2441
        %vm2443 = vweird.f32 %v2000
        %vm2444 = vweird.f32 %v2438
        %vm2445 = vmor %vm2443, %vm2444
        %v2446 = vsel %vm2445, %v2438, %v2442
        %v2447 = vand.u32 2147483647, %v2000
        %vm2448 = vcmp.eq.f32.partialorder %v2447, 8.507059e+37
        %v2449 = vand.u32 %v2000, 2147483648
        %v2450 = vor.u32 1.1754944e-38, %v2449
        %v2451 = vsel %vm2448, %v2450, %v2446
        %v2452 = vmul.f32 1.0, %v2451
        %v2453 = vrcp.pop %v2001
        %v2454 = vmul.f32 %v2001, %v2453
        %v2455 = vsub.f32 1.0, %v2454
        %v2456 = vmul.f32 %v2453, %v2455
        %v2457 = vadd.f32 %v2453, %v2456
        %vm2458 = vweird.f32 %v2001
        %vm2459 = vweird.f32 %v2453
        %vm2460 = vmor %vm2458, %vm2459
        %v2461 = vsel %vm2460, %v2453, %v2457
        %v2462 = vand.u32 2147483647, %v2001
        %vm2463 = vcmp.eq.f32.partialorder %v2462, 8.507059e+37
        %v2464 = vand.u32 %v2001, 2147483648
        %v2465 = vor.u32 1.1754944e-38, %v2464
        %v2466 = vsel %vm2463, %v2465, %v2461
        %v2467 = vmul.f32 1.0, %v2466
        %v2468 = vrcp.pop %v2002
        %v2469 = vmul.f32 %v2002, %v2468
        %v2470 = vsub.f32 1.0, %v2469
        %v2471 = vmul.f32 %v2468, %v2470
        %v2472 = vadd.f32 %v2468, %v2471
        %vm2473 = vweird.f32 %v2002
        %vm2474 = vweird.f32 %v2468
        %vm2475 = vmor %vm2473, %vm2474
        %v2476 = vsel %vm2475, %v2468, %v2472
        %v2477 = vand.u32 2147483647, %v2002
        %vm2478 = vcmp.eq.f32.partialorder %v2477, 8.507059e+37
        %v2479 = vand.u32 %v2002, 2147483648
        %v2480 = vor.u32 1.1754944e-38, %v2479
        %v2481 = vsel %vm2478, %v2480, %v2476
        %v2482 = vmul.f32 1.0, %v2481
        %v2483 = vmul.f32 %v1796, %v2017
        %v2484 = vmul.f32 %v1798, %v2032
        %v2485 = vmul.f32 %v1801, %v2047
        %v2486 = vmul.f32 %v1803, %v2062
        %v2487 = vmul.f32 %v1806, %v2077
        %v2488 = vmul.f32 %v1808, %v2092
        %v2489 = vmul.f32 %v1811, %v2107
        %v2490 = vmul.f32 %v1813, %v2122
        %v2491 = vmul.f32 %v1816, %v2137
        %v2492 = vmul.f32 %v1818, %v2152
        %v2493 = vmul.f32 %v1821, %v2167
        %v2494 = vmul.f32 %v1823, %v2182
        %v2495 = vmul.f32 %v1826, %v2197
        %v2496 = vmul.f32 %v1828, %v2212
        %v2497 = vmul.f32 %v1831, %v2227
        %v2498 = vmul.f32 %v1833, %v2242
        %v2499 = vmul.f32 %v1836, %v2257
        %v2500 = vmul.f32 %v1838, %v2272
        %v2501 = vmul.f32 %v1841, %v2287
        %v2502 = vmul.f32 %v1843, %v2302
        %v2503 = vmul.f32 %v1846, %v2317
        %v2504 = vmul.f32 %v1848, %v2332
        %v2505 = vmul.f32 %v1851, %v2347
        %v2506 = vmul.f32 %v1853, %v2362
        %v2507 = vmul.f32 %v1856, %v2377
        %v2508 = vmul.f32 %v1858, %v2392
        %v2509 = vmul.f32 %v1861, %v2407
        %v2510 = vmul.f32 %v1863, %v2422
        %v2511 = vmul.f32 %v1866, %v2437
        %v2512 = vmul.f32 %v1868, %v2452
        %v2513 = vmul.f32 %v1871, %v2467
        %v2514 = vmul.f32 %v1873, %v2482
        %v2515 = vpack.c.bf16 %v2484, %v2483
        %v2516 = vpack.c.bf16 %v2486, %v2485
        %v2517 = vpack.c.bf16 %v2488, %v2487
        %v2518 = vpack.c.bf16 %v2490, %v2489
        %v2519 = vpack.c.bf16 %v2492, %v2491
        %v2520 = vpack.c.bf16 %v2494, %v2493
        %v2521 = vpack.c.bf16 %v2496, %v2495
        %v2522 = vpack.c.bf16 %v2498, %v2497
        %v2523 = vpack.c.bf16 %v2500, %v2499
        %v2524 = vpack.c.bf16 %v2502, %v2501
        %v2525 = vpack.c.bf16 %v2504, %v2503
        %v2526 = vpack.c.bf16 %v2506, %v2505
        %v2527 = vpack.c.bf16 %v2508, %v2507
        %v2528 = vpack.c.bf16 %v2510, %v2509
        %v2529 = vpack.c.bf16 %v2512, %v2511
        %v2530 = vpack.c.bf16 %v2514, %v2513
        %v2531 = vld [vmem:[%s3] sm:$0xf]
        %v2532 = vld [vmem:[%s3 + $0x4] sm:$0xf]
        %v2533 = vld [vmem:[%s3 + $0x8] sm:$0xf]
        %v2534 = vld [vmem:[%s3 + $0xc] sm:$0xf]
        %v2535 = vld [vmem:[%s3 + $0x10] sm:$0xf]
        %v2536 = vld [vmem:[%s3 + $0x14] sm:$0xf]
        %v2537 = vld [vmem:[%s3 + $0x18] sm:$0xf]
        %v2538 = vld [vmem:[%s3 + $0x1c] sm:$0xf]
        %v2539 = vld [vmem:[%s3 + $0x20] sm:$0xf]
        %v2540 = vld [vmem:[%s3 + $0x24] sm:$0xf]
        %v2541 = vld [vmem:[%s3 + $0x28] sm:$0xf]
        %v2542 = vld [vmem:[%s3 + $0x2c] sm:$0xf]
        %v2543 = vld [vmem:[%s3 + $0x30] sm:$0xf]
        %v2544 = vld [vmem:[%s3 + $0x34] sm:$0xf]
        %v2545 = vld [vmem:[%s3 + $0x38] sm:$0xf]
        %v2546 = vld [vmem:[%s3 + $0x3c] sm:$0xf]
        %v2547 = vld [vmem:[%s4] sm:$0x1]
        %v2549 = vperm.slane %v2547, 0
        %v2567 = vunpack.c.l.b16 %v2531
        %v2568 = vunpack.c.l.b16 %v2532
        %v2569 = vunpack.c.l.b16 %v2533
        %v2570 = vunpack.c.l.b16 %v2534
        %v2571 = vunpack.c.l.b16 %v2535
        %v2572 = vunpack.c.l.b16 %v2536
        %v2573 = vunpack.c.l.b16 %v2537
        %v2574 = vunpack.c.l.b16 %v2538
        %v2575 = vunpack.c.l.b16 %v2539
        %v2576 = vunpack.c.l.b16 %v2540
        %v2577 = vunpack.c.l.b16 %v2541
        %v2578 = vunpack.c.l.b16 %v2542
        %v2579 = vunpack.c.l.b16 %v2543
        %v2580 = vunpack.c.l.b16 %v2544
        %v2581 = vunpack.c.l.b16 %v2545
        %v2582 = vunpack.c.l.b16 %v2546
        %v2583 = vpack.c.b16 %v2568, %v2567
        %v2584 = vpack.c.b16 %v2570, %v2569
        %v2585 = vpack.c.b16 %v2572, %v2571
        %v2586 = vpack.c.b16 %v2574, %v2573
        %v2587 = vpack.c.b16 %v2576, %v2575
        %v2588 = vpack.c.b16 %v2578, %v2577
        %v2589 = vpack.c.b16 %v2580, %v2579
        %v2590 = vpack.c.b16 %v2582, %v2581
        %2599 = vmatpush.bf16.msra.mxu0 %v2590
        %2600 = vmatpush.bf16.msra.mxu0 %v2589
        %2601 = vmatpush.bf16.msra.mxu0 %v2588
        %2602 = vmatpush.bf16.msra.mxu0 %v2587
        %2603 = vmatpush.bf16.msra.mxu0 %v2586
        %2604 = vmatpush.bf16.msra.mxu0 %v2585
        %2605 = vmatpush.bf16.msra.mxu0 %v2584
        %2606 = vmatpush.bf16.msra.mxu0 %v2583
        %2607 = vmatmul.bf16.gmra.mxu0 %v2515
        %v2608 = vpop.f32.mrf.mxu0
        %v2609 = vadd.f32 %v2549, %v2608
        %v2610 = vpop.f32.mrf.mxu0
        %v2611 = vadd.f32 %v2549, %v2610
        %2612 = vmatmul.bf16.gmra.mxu0 %v2516
        %v2613 = vpop.f32.mrf.mxu0
        %v2614 = vadd.f32 %v2549, %v2613
        %v2615 = vpop.f32.mrf.mxu0
        %v2616 = vadd.f32 %v2549, %v2615
        %2617 = vmatmul.bf16.gmra.mxu0 %v2517
        %v2618 = vpop.f32.mrf.mxu0
        %v2619 = vadd.f32 %v2549, %v2618
        %v2620 = vpop.f32.mrf.mxu0
        %v2621 = vadd.f32 %v2549, %v2620
        %2622 = vmatmul.bf16.gmra.mxu0 %v2518
        %v2623 = vpop.f32.mrf.mxu0
        %v2624 = vadd.f32 %v2549, %v2623
        %v2625 = vpop.f32.mrf.mxu0
        %v2626 = vadd.f32 %v2549, %v2625
        %2627 = vmatmul.bf16.gmra.mxu0 %v2519
        %v2628 = vpop.f32.mrf.mxu0
        %v2629 = vadd.f32 %v2549, %v2628
        %v2630 = vpop.f32.mrf.mxu0
        %v2631 = vadd.f32 %v2549, %v2630
        %2632 = vmatmul.bf16.gmra.mxu0 %v2520
        %v2633 = vpop.f32.mrf.mxu0
        %v2634 = vadd.f32 %v2549, %v2633
        %v2635 = vpop.f32.mrf.mxu0
        %v2636 = vadd.f32 %v2549, %v2635
        %2637 = vmatmul.bf16.gmra.mxu0 %v2521
        %v2638 = vpop.f32.mrf.mxu0
        %v2639 = vadd.f32 %v2549, %v2638
        %v2640 = vpop.f32.mrf.mxu0
        %v2641 = vadd.f32 %v2549, %v2640
        %2642 = vmatmul.bf16.gmra.mxu0 %v2522
        %v2643 = vpop.f32.mrf.mxu0
        %v2644 = vadd.f32 %v2549, %v2643
        %v2645 = vpop.f32.mrf.mxu0
        %v2646 = vadd.f32 %v2549, %v2645
        %2647 = vmatmul.bf16.gmra.mxu0 %v2523
        %v2648 = vpop.f32.mrf.mxu0
        %v2649 = vadd.f32 %v2549, %v2648
        %v2650 = vpop.f32.mrf.mxu0
        %v2651 = vadd.f32 %v2549, %v2650
        %2652 = vmatmul.bf16.gmra.mxu0 %v2524
        %v2653 = vpop.f32.mrf.mxu0
        %v2654 = vadd.f32 %v2549, %v2653
        %v2655 = vpop.f32.mrf.mxu0
        %v2656 = vadd.f32 %v2549, %v2655
        %2657 = vmatmul.bf16.gmra.mxu0 %v2525
        %v2658 = vpop.f32.mrf.mxu0
        %v2659 = vadd.f32 %v2549, %v2658
        %v2660 = vpop.f32.mrf.mxu0
        %v2661 = vadd.f32 %v2549, %v2660
        %2662 = vmatmul.bf16.gmra.mxu0 %v2526
        %v2663 = vpop.f32.mrf.mxu0
        %v2664 = vadd.f32 %v2549, %v2663
        %v2665 = vpop.f32.mrf.mxu0
        %v2666 = vadd.f32 %v2549, %v2665
        %2667 = vmatmul.bf16.gmra.mxu0 %v2527
        %v2668 = vpop.f32.mrf.mxu0
        %v2669 = vadd.f32 %v2549, %v2668
        %v2670 = vpop.f32.mrf.mxu0
        %v2671 = vadd.f32 %v2549, %v2670
        %2672 = vmatmul.bf16.gmra.mxu0 %v2528
        %v2673 = vpop.f32.mrf.mxu0
        %v2674 = vadd.f32 %v2549, %v2673
        %v2675 = vpop.f32.mrf.mxu0
        %v2676 = vadd.f32 %v2549, %v2675
        %2677 = vmatmul.bf16.gmra.mxu0 %v2529
        %v2678 = vpop.f32.mrf.mxu0
        %v2679 = vadd.f32 %v2549, %v2678
        %v2680 = vpop.f32.mrf.mxu0
        %v2681 = vadd.f32 %v2549, %v2680
        %2682 = vmatmul.bf16.gmra.mxu0 %v2530
        %v2683 = vpop.f32.mrf.mxu0
        %v2684 = vadd.f32 %v2549, %v2683
        %v2685 = vpop.f32.mrf.mxu0
        %v2686 = vadd.f32 %v2549, %v2685
        %2687 = vdwg.mxu0
        %2688 = vst [vmem:[%s218] sm:$0xff] %v2609
        %2689 = vst [vmem:[%s218 + $0x8] sm:$0xff] %v2611
        %2690 = vst [vmem:[%s218 + $0x10] sm:$0xff] %v2614
        %2691 = vst [vmem:[%s218 + $0x18] sm:$0xff] %v2616
        %2692 = vst [vmem:[%s218 + $0x20] sm:$0xff] %v2619
        %2693 = vst [vmem:[%s218 + $0x28] sm:$0xff] %v2621
        %2694 = vst [vmem:[%s218 + $0x30] sm:$0xff] %v2624
        %2695 = vst [vmem:[%s218 + $0x38] sm:$0xff] %v2626
        %2696 = vst [vmem:[%s218 + $0x40] sm:$0xff] %v2629
        %2697 = vst [vmem:[%s218 + $0x48] sm:$0xff] %v2631
        %2698 = vst [vmem:[%s218 + $0x50] sm:$0xff] %v2634
        %2699 = vst [vmem:[%s218 + $0x58] sm:$0xff] %v2636
        %2700 = vst [vmem:[%s218 + $0x60] sm:$0xff] %v2639
        %2701 = vst [vmem:[%s218 + $0x68] sm:$0xff] %v2641
        %2702 = vst [vmem:[%s218 + $0x70] sm:$0xff] %v2644
        %2703 = vst [vmem:[%s218 + $0x78] sm:$0xff] %v2646
        %2704 = vst [vmem:[%s218 + $0x80] sm:$0xff] %v2649
        %2705 = vst [vmem:[%s218 + $0x88] sm:$0xff] %v2651
        %2706 = vst [vmem:[%s218 + $0x90] sm:$0xff] %v2654
        %2707 = vst [vmem:[%s218 + $0x98] sm:$0xff] %v2656
        %2708 = vst [vmem:[%s218 + $0xa0] sm:$0xff] %v2659
        %2709 = vst [vmem:[%s218 + $0xa8] sm:$0xff] %v2661
        %2710 = vst [vmem:[%s218 + $0xb0] sm:$0xff] %v2664
        %2711 = vst [vmem:[%s218 + $0xb8] sm:$0xff] %v2666
        %2712 = vst [vmem:[%s218 + $0xc0] sm:$0xff] %v2669
        %2713 = vst [vmem:[%s218 + $0xc8] sm:$0xff] %v2671
        %2714 = vst [vmem:[%s218 + $0xd0] sm:$0xff] %v2674
        %2715 = vst [vmem:[%s218 + $0xd8] sm:$0xff] %v2676
        %2716 = vst [vmem:[%s218 + $0xe0] sm:$0xff] %v2679
        %2717 = vst [vmem:[%s218 + $0xe8] sm:$0xff] %v2681
        %2718 = vst [vmem:[%s218 + $0xf0] sm:$0xff] %v2684
        %2719 = vst [vmem:[%s218 + $0xf8] sm:$0xff] %v2686
        %s2720 = sand.u32 %s137, 1
        %s2721 = scalar_lea.sflag [#allocation4], %s2720
        %s2722 = sand.u32 %s137, 1
        %s2723 = smul.addr %s2722, 256
        %s2724 = scalar_lea.vmem [#allocation3], %s2723
        // Predicated region
        $region41: #{kgram_mlp_seq_forward_prepared.1} parent=39 // pred_check
          %p2725 = pneg %p147
        $region42: #{kgram_mlp_seq_forward_prepared.1} parent=39 // pred_check_branch
          %2727 = sbr.rel (%p2725) target = $region44
        $region43: #{kgram_mlp_seq_forward_prepared.1} parent=39 // pred_region
          %s2728 = smul.u32 32, %s19
          %2730 = vsyncadd %s2721, 0
          %s2731 = smul.addr %s2728, 8
          %s2732 = scalar_lea.hbm %s5, %s2731
          %s2733 = sshll.u32 %s2724, 4
          %s2734 = int_to_ptr.vmem [resolvable:$true] %s2733
          %s2735 = sshll.u32 %s2732, 4
          %s2736 = int_to_ptr.hbm [resolvable:$true] %s2735
          %2741 = dma.vmem_to_hbm [thread:$0]  %s2734, 4096, %s2736, %s2721, 128, 128, 8
        $region44: #{kgram_mlp_seq_forward_prepared.1} parent=39 // pred_fallthru
          _
      $region40: #{kgram_mlp_seq_forward_prepared.1} parent=5 // pred_fallthru
        _
      %p2742 = scmp.le.s32.totalorder 2, %s14
      // Predicated region
      $region45: #{kgram_mlp_seq_forward_prepared.1} parent=5 // pred_check
        %p2743 = pneg %p2742
      $region46: #{kgram_mlp_seq_forward_prepared.1} parent=5 // pred_check_branch
        %2745 = sbr.rel (%p2743) target = $region48
      $region47: #{kgram_mlp_seq_forward_prepared.1} parent=5 // pred_region
        %s2746 = ssub.s32 %s14, 2
        // Predicated region
        $region49: #{kgram_mlp_seq_forward_prepared.1} parent=47 // pred_check
          %p2747 = pneg %p153
        $region50: #{kgram_mlp_seq_forward_prepared.1} parent=47 // pred_check_branch
          %2749 = sbr.rel (%p2747) target = $region52
        $region51: #{kgram_mlp_seq_forward_prepared.1} parent=47 // pred_region
          %s2750 = sand.u32 %s138, 1
          %s2751 = scalar_lea.sflag [#allocation4], %s2750
          %s2752 = sand.u32 %s138, 1
          %s2753 = smul.addr %s2752, 256
          %s2754 = scalar_lea.vmem [#allocation3], %s2753
          %2756 = dma.done %s2751, 4096
        $region52: #{kgram_mlp_seq_forward_prepared.1} parent=47 // pred_fallthru
          _
      $region48: #{kgram_mlp_seq_forward_prepared.1} parent=5 // pred_fallthru
        _
    $region6: #{kgram_mlp_seq_forward_prepared.1} parent=1 // loop_footer
      %s18 = sadd.s32 1, %s14
    $region7: #{kgram_mlp_seq_forward_prepared.1} parent=1 // loop_footer_branch
      %13 = sbr.rel target = $region3
    $region8: #{kgram_mlp_seq_forward_prepared.1} parent=1 // loop_exit
      _
    %2757 = vsyncpa [#allocation4], 1
    %s2758 = scalar_lea.sflag [#allocation4], 1
    %2759 = vsyncpa %s2758, 1

</llo_original>
